<compile_context>
chip_gen: v7x
topology: tpu7x:2x2x1
jax: 0.10.0
libtpu: 0.0.40
codegen_flags: <defaults>
</compile_context>

<pallas_src>
import functools

import jax
import jax.numpy as jnp
from jax.experimental import pallas as pl
from jax.experimental.pallas import tpu as pltpu

INPUT_SIZE = 10
HIDDEN_SIZE = 20
NUM_LAYERS = 2          # kernel below is hard-wired to 2 layers
NUM_CLASSES = 2

D_PAD = 16              # INPUT_SIZE padded up (ones "bias" column at index 10)

# Row offsets inside the packed parameter array (all 8-aligned starts).
_R_WIH0 = 0     # rows  0..15 : W_ih0 (D,4H) in rows 0..9, fused bias b0 in row 10
_R_WHH0 = 16    # rows 16..35 : W_hh0 (H,4H)
_R_WCAT1 = 40   # rows 40..79 : [W_ih1; W_hh1] (2H,4H)
_R_B1 = 80      # row  80     : b1 (1,4H)
_R_WFC = 88     # rows 88..107: W_fc (H,C) in lanes 0..C-1, zero elsewhere
_R_BFC = 112    # row 112     : b_fc in lanes 0..C-1
_PACK_ROWS = 120


def _lstm_fc_kernel(x_ref, p_ref, out_ref, *, seq_len, batch):
    """x_ref: (T*B, D_PAD) time-major rows (ones column at col INPUT_SIZE);
    p_ref: (_PACK_ROWS, 4H) packed params; out_ref: (B, C)."""
    T, B = seq_len, batch
    H = HIDDEN_SIZE
    G = 4 * H
    H3 = 3 * H
    C = NUM_CLASSES

    # One-time, loop-invariant loads of the packed params (hoisted).
    w_ih0 = p_ref[_R_WIH0:_R_WIH0 + D_PAD, :]            # (16, 4H) incl. bias row
    w_hh0 = p_ref[_R_WHH0:_R_WHH0 + H, :]                # (H, 4H)
    w_cat1 = p_ref[_R_WCAT1:_R_WCAT1 + 2 * H, :]         # (2H, 4H)
    b1 = jnp.broadcast_to(p_ref[_R_B1:_R_B1 + 1, :], (B, G))
    w_fc = p_ref[_R_WFC:_R_WFC + H, :]                   # (H, 4H), nonzero lanes [0,C)
    b_fc = p_ref[_R_BFC:_R_BFC + 1, :]                   # (1, 4H)

    # Batched layer-0 input projection for all timesteps (bias rides along
    # via the ones column of x): a single (T*B, 16) @ (16, 4H) MXU pass.
    gx0 = jnp.dot(x_ref[...], w_ih0, preferred_element_type=jnp.float32)  # (T*B, 4H)

    def act(gates):
        # Gate columns are packed (i, f, o, g): one wide sigmoid + one tanh.
        s = jax.nn.sigmoid(gates[:, :H3])
        g = jnp.tanh(gates[:, H3:])
        return s[:, 0:H], s[:, H:2 * H], s[:, 2 * H:H3], g

    zeros = jnp.zeros((B, H), jnp.float32)
    h0 = c0 = h1 = c1 = zeros

    # T is small and static -> fully unrolled; state stays in vregs and the
    # scheduler can overlap layer-1 of step t with layer-0 of step t+1.
    for t in range(T):
        # Layer 0: precomputed input projection + one recurrent matmul.
        gates0 = gx0[t * B:(t + 1) * B, :] + jnp.dot(
            h0, w_hh0, preferred_element_type=jnp.float32)
        i0, f0, o0, g0 = act(gates0)
        c0 = f0 * c0 + i0 * g0
        h0 = o0 * jnp.tanh(c0)

        # Layer 1: fused [x; h] @ [W_ih1; W_hh1] single matmul per step.
        hh = jnp.concatenate([h0, h1], axis=-1)          # (B, 2H)
        gates1 = jnp.dot(hh, w_cat1, preferred_element_type=jnp.float32) + b1
        i1, f1, o1, g1 = act(gates1)
        c1 = f1 * c1 + i1 * g1
        h1 = o1 * jnp.tanh(c1)

    # fc(out[:, -1, :]) -- W_fc lives in lanes 0..C-1 of a 4H-wide slab, so
    # the first C lanes of the matmul result are the logits.
    logits = jnp.dot(h1, w_fc, preferred_element_type=jnp.float32) + b_fc
    out_ref[...] = logits[:, :C]


def init_raw_params(key):
    """Raw PyTorch-layout params: weight_ih_l* (4H, D_in), weight_hh_l* (4H, H),
    separate b_ih/b_hh, gate rows stacked in PyTorch (i, f, g, o) order."""
    H, D, C = HIDDEN_SIZE, INPUT_SIZE, NUM_CLASSES
    k = 1.0 / (float(H) ** 0.5)
    keys = jax.random.split(key, 10)

    def u(kk, shape):
        return jax.random.uniform(kk, shape, jnp.float32, -k, k)

    return dict(
        w_ih_l0=u(keys[0], (4 * H, D)),
        w_hh_l0=u(keys[1], (4 * H, H)),
        b_ih_l0=u(keys[2], (4 * H,)),
        b_hh_l0=u(keys[3], (4 * H,)),
        w_ih_l1=u(keys[4], (4 * H, H)),
        w_hh_l1=u(keys[5], (4 * H, H)),
        b_ih_l1=u(keys[6], (4 * H,)),
        b_hh_l1=u(keys[7], (4 * H,)),
        fc_w=u(keys[8], (C, H)),
        fc_b=u(keys[9], (C,)),
    )


def pack_params(raw):
    """Fuse / reorder / pack all params into one (_PACK_ROWS, 4H) f32 array."""
    H, C = HIDDEN_SIZE, NUM_CLASSES
    G = 4 * H
    # Column permutation: PyTorch gate order (i, f, g, o) -> (i, f, o, g) so
    # the three sigmoid gates are contiguous lanes [0:3H] and tanh is [3H:4H].
    perm = jnp.concatenate([jnp.arange(0, 2 * H),
                            jnp.arange(3 * H, 4 * H),
                            jnp.arange(2 * H, 3 * H)])

    def fuse(w):                      # (4H, D_in) -> (D_in, 4H), reordered cols
        return w.T[:, perm]

    p = jnp.zeros((_PACK_ROWS, G), jnp.float32)
    p = p.at[_R_WIH0:_R_WIH0 + INPUT_SIZE, :].set(fuse(raw['w_ih_l0']))
    p = p.at[_R_WIH0 + INPUT_SIZE, :].set((raw['b_ih_l0'] + raw['b_hh_l0'])[perm])
    p = p.at[_R_WHH0:_R_WHH0 + H, :].set(fuse(raw['w_hh_l0']))
    p = p.at[_R_WCAT1:_R_WCAT1 + H, :].set(fuse(raw['w_ih_l1']))
    p = p.at[_R_WCAT1 + H:_R_WCAT1 + 2 * H, :].set(fuse(raw['w_hh_l1']))
    p = p.at[_R_B1, :].set((raw['b_ih_l1'] + raw['b_hh_l1'])[perm])
    p = p.at[_R_WFC:_R_WFC + H, :C].set(raw['fc_w'].T)
    p = p.at[_R_BFC, :C].set(raw['fc_b'])
    return p


def lstm_forward(x, packed):
    """x: (B, T, D) batch-first (same as the PyTorch module). Returns (B, C)."""
    B, T, D = x.shape
    C = NUM_CLASSES

    # Time-major, flattened to (T*B, D_PAD) with a ones column at index D so
    # the layer-0 bias rides along the batched input projection.
    x_tm = jnp.transpose(x, (1, 0, 2)).astype(jnp.float32).reshape(T * B, D)
    ones = jnp.ones((T * B, 1), jnp.float32)
    zpad = jnp.zeros((T * B, D_PAD - D - 1), jnp.float32)
    x_pad = jnp.concatenate([x_tm, ones, zpad], axis=-1)      # (T*B, D_PAD)

    vmem = pltpu.MemorySpace.VMEM
    # TODO(synk): for large B, add a leading batch-tile grid axis marked
    # "parallel" (uses the 2nd TensorCore on v7x) and size tiles against
    # 64 MiB VMEM; at these toy shapes a single gridless resident call wins.
    return pl.pallas_call(
        functools.partial(_lstm_fc_kernel, seq_len=T, batch=B),
        out_shape=jax.ShapeDtypeStruct((B, C), jnp.float32),
        in_specs=[pl.BlockSpec(memory_space=vmem),
                  pl.BlockSpec(memory_space=vmem)],
        out_specs=pl.BlockSpec(memory_space=vmem),
    )(x_pad, packed)


def lstm_reference(x, raw):
    """Pure-JAX reference with PyTorch nn.LSTM semantics on the RAW
    (unfused, un-reordered) weights — validates the packing/reordering."""
    B, T, D = x.shape
    H = HIDDEN_SIZE

    def cell(x_t, h, c, w_ih, w_hh, b_ih, b_hh):
        gates = x_t @ w_ih.T + h @ w_hh.T + b_ih + b_hh       # PyTorch (i,f,g,o)
        i = jax.nn.sigmoid(gates[:, 0 * H:1 * H])
        f = jax.nn.sigmoid(gates[:, 1 * H:2 * H])
        g = jnp.tanh(gates[:, 2 * H:3 * H])
        o = jax.nn.sigmoid(gates[:, 3 * H:4 * H])
        c_new = f * c + i * g
        return o * jnp.tanh(c_new), c_new

    h0 = c0 = h1 = c1 = jnp.zeros((B, H), jnp.float32)
    for t in range(T):
        x_t = x[:, t, :]
        h0, c0 = cell(x_t, h0, c0, raw['w_ih_l0'], raw['w_hh_l0'],
                      raw['b_ih_l0'], raw['b_hh_l0'])
        h1, c1 = cell(h0, h1, c1, raw['w_ih_l1'], raw['w_hh_l1'],
                      raw['b_ih_l1'], raw['b_hh_l1'])
    return h1 @ raw['fc_w'].T + raw['fc_b']


if __name__ == "__main__":
    key = jax.random.PRNGKey(0)
    k_x, k_p = jax.random.split(key)

    B, T = 2, 8
    x = jax.random.normal(k_x, (B, T, INPUT_SIZE), jnp.float32)
    raw = init_raw_params(k_p)
    packed = pack_params(raw)

    out = lstm_forward(x, packed)
    out = jax.block_until_ready(out)

    ref = lstm_reference(x, raw)
    assert out.shape == (B, NUM_CLASSES)
    assert jnp.allclose(out, ref, atol=1e-4, rtol=1e-4), (out, ref)

    print("KERNEL_OK")
</pallas_src>

<mosaic_0001>
module attributes {stable_mosaic.version = 11 : i64} {
  func.func @_lstm_fc_kernel(%arg0: memref<16x16xf32, #tpu.memory_space<vmem>>, %arg1: memref<120x80xf32, #tpu.memory_space<vmem>>, %arg2: memref<2x2xf32, #tpu.memory_space<vmem>>) attributes {dimension_semantics = [], scalar_prefetch = 0 : i64, scratch_operands = 0 : i64, tpu.core_type = #tpu.core_type<tc>} {
    %c0 = arith.constant 0 : index
    %c0_0 = arith.constant 0 : index
    %0 = vector.load %arg1[%c0, %c0_0] : memref<120x80xf32, #tpu.memory_space<vmem>>, vector<16x80xf32>
    %c16 = arith.constant 16 : index
    %c0_1 = arith.constant 0 : index
    %1 = vector.load %arg1[%c16, %c0_1] : memref<120x80xf32, #tpu.memory_space<vmem>>, vector<20x80xf32>
    %c40 = arith.constant 40 : index
    %c0_2 = arith.constant 0 : index
    %2 = vector.load %arg1[%c40, %c0_2] : memref<120x80xf32, #tpu.memory_space<vmem>>, vector<40x80xf32>
    %c80 = arith.constant 80 : index
    %c0_3 = arith.constant 0 : index
    %3 = vector.load %arg1[%c80, %c0_3] : memref<120x80xf32, #tpu.memory_space<vmem>>, vector<1x80xf32>
    %4 = vector.shape_cast %3 : vector<1x80xf32> to vector<1x80xf32>
    %5 = vector.broadcast %4 : vector<1x80xf32> to vector<2x80xf32>
    %c88 = arith.constant 88 : index
    %c0_4 = arith.constant 0 : index
    %6 = vector.load %arg1[%c88, %c0_4] : memref<120x80xf32, #tpu.memory_space<vmem>>, vector<20x80xf32>
    %c112 = arith.constant 112 : index
    %c0_5 = arith.constant 0 : index
    %7 = vector.load %arg1[%c112, %c0_5] : memref<120x80xf32, #tpu.memory_space<vmem>>, vector<1x80xf32>
    %c0_6 = arith.constant 0 : index
    %c0_7 = arith.constant 0 : index
    %8 = vector.load %arg0[%c0_6, %c0_7] : memref<16x16xf32, #tpu.memory_space<vmem>>, vector<16x16xf32>
    %cst = arith.constant dense<0.000000e+00> : vector<16x80xf32>
    %9 = tpu.matmul %8, %0, %cst {dimension_numbers = #tpu.dot_dimension_numbers<[1], [0], [0], [1], [0, 0, 1, 1], [], []>} : vector<16x16xf32>, vector<16x80xf32>, vector<16x80xf32> -> vector<16x80xf32>
    %cst_8 = arith.constant 0.000000e+00 : f32
    %10 = vector.broadcast %cst_8 : f32 to vector<2x20xf32>
    %11 = vector.extract_strided_slice %9 {offsets = [0, 0], sizes = [2, 80], strides = [1, 1]} : vector<16x80xf32> to vector<2x80xf32>
    %cst_9 = arith.constant dense<0.000000e+00> : vector<2x80xf32>
    %12 = tpu.matmul %10, %1, %cst_9 {dimension_numbers = #tpu.dot_dimension_numbers<[1], [0], [0], [1], [0, 0, 1, 1], [], []>} : vector<2x20xf32>, vector<20x80xf32>, vector<2x80xf32> -> vector<2x80xf32>
    %13 = arith.addf %11, %12 : vector<2x80xf32>
    %14 = vector.extract_strided_slice %13 {offsets = [0, 0], sizes = [2, 60], strides = [1, 1]} : vector<2x80xf32> to vector<2x60xf32>
    %15 = arith.negf %14 : vector<2x60xf32>
    %16 = math.exp %15 : vector<2x60xf32>
    %cst_10 = arith.constant 1.000000e+00 : f32
    %17 = vector.broadcast %cst_10 : f32 to vector<2x60xf32>
    %18 = arith.addf %17, %16 : vector<2x60xf32>
    %19 = arith.divf %17, %18 : vector<2x60xf32>
    %20 = vector.extract_strided_slice %13 {offsets = [0, 60], sizes = [2, 20], strides = [1, 1]} : vector<2x80xf32> to vector<2x20xf32>
    %21 = math.tanh %20 : vector<2x20xf32>
    %22 = vector.extract_strided_slice %19 {offsets = [0, 0], sizes = [2, 20], strides = [1, 1]} : vector<2x60xf32> to vector<2x20xf32>
    %23 = vector.extract_strided_slice %19 {offsets = [0, 20], sizes = [2, 20], strides = [1, 1]} : vector<2x60xf32> to vector<2x20xf32>
    %24 = vector.extract_strided_slice %19 {offsets = [0, 40], sizes = [2, 20], strides = [1, 1]} : vector<2x60xf32> to vector<2x20xf32>
    %25 = arith.mulf %23, %10 : vector<2x20xf32>
    %26 = arith.mulf %22, %21 : vector<2x20xf32>
    %27 = arith.addf %25, %26 : vector<2x20xf32>
    %28 = math.tanh %27 : vector<2x20xf32>
    %29 = arith.mulf %24, %28 : vector<2x20xf32>
    %30 = tpu.concatenate %29, %10 in 1 : vector<2x20xf32>, vector<2x20xf32> -> vector<2x40xf32>
    %cst_11 = arith.constant dense<0.000000e+00> : vector<2x80xf32>
    %31 = tpu.matmul %30, %2, %cst_11 {dimension_numbers = #tpu.dot_dimension_numbers<[1], [0], [0], [1], [0, 0, 1, 1], [], []>} : vector<2x40xf32>, vector<40x80xf32>, vector<2x80xf32> -> vector<2x80xf32>
    %32 = arith.addf %31, %5 : vector<2x80xf32>
    %33 = vector.extract_strided_slice %32 {offsets = [0, 0], sizes = [2, 60], strides = [1, 1]} : vector<2x80xf32> to vector<2x60xf32>
    %34 = arith.negf %33 : vector<2x60xf32>
    %35 = math.exp %34 : vector<2x60xf32>
    %cst_12 = arith.constant 1.000000e+00 : f32
    %36 = vector.broadcast %cst_12 : f32 to vector<2x60xf32>
    %37 = arith.addf %36, %35 : vector<2x60xf32>
    %38 = arith.divf %36, %37 : vector<2x60xf32>
    %39 = vector.extract_strided_slice %32 {offsets = [0, 60], sizes = [2, 20], strides = [1, 1]} : vector<2x80xf32> to vector<2x20xf32>
    %40 = math.tanh %39 : vector<2x20xf32>
    %41 = vector.extract_strided_slice %38 {offsets = [0, 0], sizes = [2, 20], strides = [1, 1]} : vector<2x60xf32> to vector<2x20xf32>
    %42 = vector.extract_strided_slice %38 {offsets = [0, 20], sizes = [2, 20], strides = [1, 1]} : vector<2x60xf32> to vector<2x20xf32>
    %43 = vector.extract_strided_slice %38 {offsets = [0, 40], sizes = [2, 20], strides = [1, 1]} : vector<2x60xf32> to vector<2x20xf32>
    %44 = arith.mulf %42, %10 : vector<2x20xf32>
    %45 = arith.mulf %41, %40 : vector<2x20xf32>
    %46 = arith.addf %44, %45 : vector<2x20xf32>
    %47 = math.tanh %46 : vector<2x20xf32>
    %48 = arith.mulf %43, %47 : vector<2x20xf32>
    %49 = vector.extract_strided_slice %9 {offsets = [2, 0], sizes = [2, 80], strides = [1, 1]} : vector<16x80xf32> to vector<2x80xf32>
    %cst_13 = arith.constant dense<0.000000e+00> : vector<2x80xf32>
    %50 = tpu.matmul %29, %1, %cst_13 {dimension_numbers = #tpu.dot_dimension_numbers<[1], [0], [0], [1], [0, 0, 1, 1], [], []>} : vector<2x20xf32>, vector<20x80xf32>, vector<2x80xf32> -> vector<2x80xf32>
    %51 = arith.addf %49, %50 : vector<2x80xf32>
    %52 = vector.extract_strided_slice %51 {offsets = [0, 0], sizes = [2, 60], strides = [1, 1]} : vector<2x80xf32> to vector<2x60xf32>
    %53 = arith.negf %52 : vector<2x60xf32>
    %54 = math.exp %53 : vector<2x60xf32>
    %cst_14 = arith.constant 1.000000e+00 : f32
    %55 = vector.broadcast %cst_14 : f32 to vector<2x60xf32>
    %56 = arith.addf %55, %54 : vector<2x60xf32>
    %57 = arith.divf %55, %56 : vector<2x60xf32>
    %58 = vector.extract_strided_slice %51 {offsets = [0, 60], sizes = [2, 20], strides = [1, 1]} : vector<2x80xf32> to vector<2x20xf32>
    %59 = math.tanh %58 : vector<2x20xf32>
    %60 = vector.extract_strided_slice %57 {offsets = [0, 0], sizes = [2, 20], strides = [1, 1]} : vector<2x60xf32> to vector<2x20xf32>
    %61 = vector.extract_strided_slice %57 {offsets = [0, 20], sizes = [2, 20], strides = [1, 1]} : vector<2x60xf32> to vector<2x20xf32>
    %62 = vector.extract_strided_slice %57 {offsets = [0, 40], sizes = [2, 20], strides = [1, 1]} : vector<2x60xf32> to vector<2x20xf32>
    %63 = arith.mulf %61, %27 : vector<2x20xf32>
    %64 = arith.mulf %60, %59 : vector<2x20xf32>
    %65 = arith.addf %63, %64 : vector<2x20xf32>
    %66 = math.tanh %65 : vector<2x20xf32>
    %67 = arith.mulf %62, %66 : vector<2x20xf32>
    %68 = tpu.concatenate %67, %48 in 1 : vector<2x20xf32>, vector<2x20xf32> -> vector<2x40xf32>
    %cst_15 = arith.constant dense<0.000000e+00> : vector<2x80xf32>
    %69 = tpu.matmul %68, %2, %cst_15 {dimension_numbers = #tpu.dot_dimension_numbers<[1], [0], [0], [1], [0, 0, 1, 1], [], []>} : vector<2x40xf32>, vector<40x80xf32>, vector<2x80xf32> -> vector<2x80xf32>
    %70 = arith.addf %69, %5 : vector<2x80xf32>
    %71 = vector.extract_strided_slice %70 {offsets = [0, 0], sizes = [2, 60], strides = [1, 1]} : vector<2x80xf32> to vector<2x60xf32>
    %72 = arith.negf %71 : vector<2x60xf32>
    %73 = math.exp %72 : vector<2x60xf32>
    %cst_16 = arith.constant 1.000000e+00 : f32
    %74 = vector.broadcast %cst_16 : f32 to vector<2x60xf32>
    %75 = arith.addf %74, %73 : vector<2x60xf32>
    %76 = arith.divf %74, %75 : vector<2x60xf32>
    %77 = vector.extract_strided_slice %70 {offsets = [0, 60], sizes = [2, 20], strides = [1, 1]} : vector<2x80xf32> to vector<2x20xf32>
    %78 = math.tanh %77 : vector<2x20xf32>
    %79 = vector.extract_strided_slice %76 {offsets = [0, 0], sizes = [2, 20], strides = [1, 1]} : vector<2x60xf32> to vector<2x20xf32>
    %80 = vector.extract_strided_slice %76 {offsets = [0, 20], sizes = [2, 20], strides = [1, 1]} : vector<2x60xf32> to vector<2x20xf32>
    %81 = vector.extract_strided_slice %76 {offsets = [0, 40], sizes = [2, 20], strides = [1, 1]} : vector<2x60xf32> to vector<2x20xf32>
    %82 = arith.mulf %80, %46 : vector<2x20xf32>
    %83 = arith.mulf %79, %78 : vector<2x20xf32>
    %84 = arith.addf %82, %83 : vector<2x20xf32>
    %85 = math.tanh %84 : vector<2x20xf32>
    %86 = arith.mulf %81, %85 : vector<2x20xf32>
    %87 = vector.extract_strided_slice %9 {offsets = [4, 0], sizes = [2, 80], strides = [1, 1]} : vector<16x80xf32> to vector<2x80xf32>
    %cst_17 = arith.constant dense<0.000000e+00> : vector<2x80xf32>
    %88 = tpu.matmul %67, %1, %cst_17 {dimension_numbers = #tpu.dot_dimension_numbers<[1], [0], [0], [1], [0, 0, 1, 1], [], []>} : vector<2x20xf32>, vector<20x80xf32>, vector<2x80xf32> -> vector<2x80xf32>
    %89 = arith.addf %87, %88 : vector<2x80xf32>
    %90 = vector.extract_strided_slice %89 {offsets = [0, 0], sizes = [2, 60], strides = [1, 1]} : vector<2x80xf32> to vector<2x60xf32>
    %91 = arith.negf %90 : vector<2x60xf32>
    %92 = math.exp %91 : vector<2x60xf32>
    %cst_18 = arith.constant 1.000000e+00 : f32
    %93 = vector.broadcast %cst_18 : f32 to vector<2x60xf32>
    %94 = arith.addf %93, %92 : vector<2x60xf32>
    %95 = arith.divf %93, %94 : vector<2x60xf32>
    %96 = vector.extract_strided_slice %89 {offsets = [0, 60], sizes = [2, 20], strides = [1, 1]} : vector<2x80xf32> to vector<2x20xf32>
    %97 = math.tanh %96 : vector<2x20xf32>
    %98 = vector.extract_strided_slice %95 {offsets = [0, 0], sizes = [2, 20], strides = [1, 1]} : vector<2x60xf32> to vector<2x20xf32>
    %99 = vector.extract_strided_slice %95 {offsets = [0, 20], sizes = [2, 20], strides = [1, 1]} : vector<2x60xf32> to vector<2x20xf32>
    %100 = vector.extract_strided_slice %95 {offsets = [0, 40], sizes = [2, 20], strides = [1, 1]} : vector<2x60xf32> to vector<2x20xf32>
    %101 = arith.mulf %99, %65 : vector<2x20xf32>
    %102 = arith.mulf %98, %97 : vector<2x20xf32>
    %103 = arith.addf %101, %102 : vector<2x20xf32>
    %104 = math.tanh %103 : vector<2x20xf32>
    %105 = arith.mulf %100, %104 : vector<2x20xf32>
    %106 = tpu.concatenate %105, %86 in 1 : vector<2x20xf32>, vector<2x20xf32> -> vector<2x40xf32>
    %cst_19 = arith.constant dense<0.000000e+00> : vector<2x80xf32>
    %107 = tpu.matmul %106, %2, %cst_19 {dimension_numbers = #tpu.dot_dimension_numbers<[1], [0], [0], [1], [0, 0, 1, 1], [], []>} : vector<2x40xf32>, vector<40x80xf32>, vector<2x80xf32> -> vector<2x80xf32>
    %108 = arith.addf %107, %5 : vector<2x80xf32>
    %109 = vector.extract_strided_slice %108 {offsets = [0, 0], sizes = [2, 60], strides = [1, 1]} : vector<2x80xf32> to vector<2x60xf32>
    %110 = arith.negf %109 : vector<2x60xf32>
    %111 = math.exp %110 : vector<2x60xf32>
    %cst_20 = arith.constant 1.000000e+00 : f32
    %112 = vector.broadcast %cst_20 : f32 to vector<2x60xf32>
    %113 = arith.addf %112, %111 : vector<2x60xf32>
    %114 = arith.divf %112, %113 : vector<2x60xf32>
    %115 = vector.extract_strided_slice %108 {offsets = [0, 60], sizes = [2, 20], strides = [1, 1]} : vector<2x80xf32> to vector<2x20xf32>
    %116 = math.tanh %115 : vector<2x20xf32>
    %117 = vector.extract_strided_slice %114 {offsets = [0, 0], sizes = [2, 20], strides = [1, 1]} : vector<2x60xf32> to vector<2x20xf32>
    %118 = vector.extract_strided_slice %114 {offsets = [0, 20], sizes = [2, 20], strides = [1, 1]} : vector<2x60xf32> to vector<2x20xf32>
    %119 = vector.extract_strided_slice %114 {offsets = [0, 40], sizes = [2, 20], strides = [1, 1]} : vector<2x60xf32> to vector<2x20xf32>
    %120 = arith.mulf %118, %84 : vector<2x20xf32>
    %121 = arith.mulf %117, %116 : vector<2x20xf32>
    %122 = arith.addf %120, %121 : vector<2x20xf32>
    %123 = math.tanh %122 : vector<2x20xf32>
    %124 = arith.mulf %119, %123 : vector<2x20xf32>
    %125 = vector.extract_strided_slice %9 {offsets = [6, 0], sizes = [2, 80], strides = [1, 1]} : vector<16x80xf32> to vector<2x80xf32>
    %cst_21 = arith.constant dense<0.000000e+00> : vector<2x80xf32>
    %126 = tpu.matmul %105, %1, %cst_21 {dimension_numbers = #tpu.dot_dimension_numbers<[1], [0], [0], [1], [0, 0, 1, 1], [], []>} : vector<2x20xf32>, vector<20x80xf32>, vector<2x80xf32> -> vector<2x80xf32>
    %127 = arith.addf %125, %126 : vector<2x80xf32>
    %128 = vector.extract_strided_slice %127 {offsets = [0, 0], sizes = [2, 60], strides = [1, 1]} : vector<2x80xf32> to vector<2x60xf32>
    %129 = arith.negf %128 : vector<2x60xf32>
    %130 = math.exp %129 : vector<2x60xf32>
    %cst_22 = arith.constant 1.000000e+00 : f32
    %131 = vector.broadcast %cst_22 : f32 to vector<2x60xf32>
    %132 = arith.addf %131, %130 : vector<2x60xf32>
    %133 = arith.divf %131, %132 : vector<2x60xf32>
    %134 = vector.extract_strided_slice %127 {offsets = [0, 60], sizes = [2, 20], strides = [1, 1]} : vector<2x80xf32> to vector<2x20xf32>
    %135 = math.tanh %134 : vector<2x20xf32>
    %136 = vector.extract_strided_slice %133 {offsets = [0, 0], sizes = [2, 20], strides = [1, 1]} : vector<2x60xf32> to vector<2x20xf32>
    %137 = vector.extract_strided_slice %133 {offsets = [0, 20], sizes = [2, 20], strides = [1, 1]} : vector<2x60xf32> to vector<2x20xf32>
    %138 = vector.extract_strided_slice %133 {offsets = [0, 40], sizes = [2, 20], strides = [1, 1]} : vector<2x60xf32> to vector<2x20xf32>
    %139 = arith.mulf %137, %103 : vector<2x20xf32>
    %140 = arith.mulf %136, %135 : vector<2x20xf32>
    %141 = arith.addf %139, %140 : vector<2x20xf32>
    %142 = math.tanh %141 : vector<2x20xf32>
    %143 = arith.mulf %138, %142 : vector<2x20xf32>
    %144 = tpu.concatenate %143, %124 in 1 : vector<2x20xf32>, vector<2x20xf32> -> vector<2x40xf32>
    %cst_23 = arith.constant dense<0.000000e+00> : vector<2x80xf32>
    %145 = tpu.matmul %144, %2, %cst_23 {dimension_numbers = #tpu.dot_dimension_numbers<[1], [0], [0], [1], [0, 0, 1, 1], [], []>} : vector<2x40xf32>, vector<40x80xf32>, vector<2x80xf32> -> vector<2x80xf32>
    %146 = arith.addf %145, %5 : vector<2x80xf32>
    %147 = vector.extract_strided_slice %146 {offsets = [0, 0], sizes = [2, 60], strides = [1, 1]} : vector<2x80xf32> to vector<2x60xf32>
    %148 = arith.negf %147 : vector<2x60xf32>
    %149 = math.exp %148 : vector<2x60xf32>
    %cst_24 = arith.constant 1.000000e+00 : f32
    %150 = vector.broadcast %cst_24 : f32 to vector<2x60xf32>
    %151 = arith.addf %150, %149 : vector<2x60xf32>
    %152 = arith.divf %150, %151 : vector<2x60xf32>
    %153 = vector.extract_strided_slice %146 {offsets = [0, 60], sizes = [2, 20], strides = [1, 1]} : vector<2x80xf32> to vector<2x20xf32>
    %154 = math.tanh %153 : vector<2x20xf32>
    %155 = vector.extract_strided_slice %152 {offsets = [0, 0], sizes = [2, 20], strides = [1, 1]} : vector<2x60xf32> to vector<2x20xf32>
    %156 = vector.extract_strided_slice %152 {offsets = [0, 20], sizes = [2, 20], strides = [1, 1]} : vector<2x60xf32> to vector<2x20xf32>
    %157 = vector.extract_strided_slice %152 {offsets = [0, 40], sizes = [2, 20], strides = [1, 1]} : vector<2x60xf32> to vector<2x20xf32>
    %158 = arith.mulf %156, %122 : vector<2x20xf32>
    %159 = arith.mulf %155, %154 : vector<2x20xf32>
    %160 = arith.addf %158, %159 : vector<2x20xf32>
    %161 = math.tanh %160 : vector<2x20xf32>
    %162 = arith.mulf %157, %161 : vector<2x20xf32>
    %163 = vector.extract_strided_slice %9 {offsets = [8, 0], sizes = [2, 80], strides = [1, 1]} : vector<16x80xf32> to vector<2x80xf32>
    %cst_25 = arith.constant dense<0.000000e+00> : vector<2x80xf32>
    %164 = tpu.matmul %143, %1, %cst_25 {dimension_numbers = #tpu.dot_dimension_numbers<[1], [0], [0], [1], [0, 0, 1, 1], [], []>} : vector<2x20xf32>, vector<20x80xf32>, vector<2x80xf32> -> vector<2x80xf32>
    %165 = arith.addf %163, %164 : vector<2x80xf32>
    %166 = vector.extract_strided_slice %165 {offsets = [0, 0], sizes = [2, 60], strides = [1, 1]} : vector<2x80xf32> to vector<2x60xf32>
    %167 = arith.negf %166 : vector<2x60xf32>
    %168 = math.exp %167 : vector<2x60xf32>
    %cst_26 = arith.constant 1.000000e+00 : f32
    %169 = vector.broadcast %cst_26 : f32 to vector<2x60xf32>
    %170 = arith.addf %169, %168 : vector<2x60xf32>
    %171 = arith.divf %169, %170 : vector<2x60xf32>
    %172 = vector.extract_strided_slice %165 {offsets = [0, 60], sizes = [2, 20], strides = [1, 1]} : vector<2x80xf32> to vector<2x20xf32>
    %173 = math.tanh %172 : vector<2x20xf32>
    %174 = vector.extract_strided_slice %171 {offsets = [0, 0], sizes = [2, 20], strides = [1, 1]} : vector<2x60xf32> to vector<2x20xf32>
    %175 = vector.extract_strided_slice %171 {offsets = [0, 20], sizes = [2, 20], strides = [1, 1]} : vector<2x60xf32> to vector<2x20xf32>
    %176 = vector.extract_strided_slice %171 {offsets = [0, 40], sizes = [2, 20], strides = [1, 1]} : vector<2x60xf32> to vector<2x20xf32>
    %177 = arith.mulf %175, %141 : vector<2x20xf32>
    %178 = arith.mulf %174, %173 : vector<2x20xf32>
    %179 = arith.addf %177, %178 : vector<2x20xf32>
    %180 = math.tanh %179 : vector<2x20xf32>
    %181 = arith.mulf %176, %180 : vector<2x20xf32>
    %182 = tpu.concatenate %181, %162 in 1 : vector<2x20xf32>, vector<2x20xf32> -> vector<2x40xf32>
    %cst_27 = arith.constant dense<0.000000e+00> : vector<2x80xf32>
    %183 = tpu.matmul %182, %2, %cst_27 {dimension_numbers = #tpu.dot_dimension_numbers<[1], [0], [0], [1], [0, 0, 1, 1], [], []>} : vector<2x40xf32>, vector<40x80xf32>, vector<2x80xf32> -> vector<2x80xf32>
    %184 = arith.addf %183, %5 : vector<2x80xf32>
    %185 = vector.extract_strided_slice %184 {offsets = [0, 0], sizes = [2, 60], strides = [1, 1]} : vector<2x80xf32> to vector<2x60xf32>
    %186 = arith.negf %185 : vector<2x60xf32>
    %187 = math.exp %186 : vector<2x60xf32>
    %cst_28 = arith.constant 1.000000e+00 : f32
    %188 = vector.broadcast %cst_28 : f32 to vector<2x60xf32>
    %189 = arith.addf %188, %187 : vector<2x60xf32>
    %190 = arith.divf %188, %189 : vector<2x60xf32>
    %191 = vector.extract_strided_slice %184 {offsets = [0, 60], sizes = [2, 20], strides = [1, 1]} : vector<2x80xf32> to vector<2x20xf32>
    %192 = math.tanh %191 : vector<2x20xf32>
    %193 = vector.extract_strided_slice %190 {offsets = [0, 0], sizes = [2, 20], strides = [1, 1]} : vector<2x60xf32> to vector<2x20xf32>
    %194 = vector.extract_strided_slice %190 {offsets = [0, 20], sizes = [2, 20], strides = [1, 1]} : vector<2x60xf32> to vector<2x20xf32>
    %195 = vector.extract_strided_slice %190 {offsets = [0, 40], sizes = [2, 20], strides = [1, 1]} : vector<2x60xf32> to vector<2x20xf32>
    %196 = arith.mulf %194, %160 : vector<2x20xf32>
    %197 = arith.mulf %193, %192 : vector<2x20xf32>
    %198 = arith.addf %196, %197 : vector<2x20xf32>
    %199 = math.tanh %198 : vector<2x20xf32>
    %200 = arith.mulf %195, %199 : vector<2x20xf32>
    %201 = vector.extract_strided_slice %9 {offsets = [10, 0], sizes = [2, 80], strides = [1, 1]} : vector<16x80xf32> to vector<2x80xf32>
    %cst_29 = arith.constant dense<0.000000e+00> : vector<2x80xf32>
    %202 = tpu.matmul %181, %1, %cst_29 {dimension_numbers = #tpu.dot_dimension_numbers<[1], [0], [0], [1], [0, 0, 1, 1], [], []>} : vector<2x20xf32>, vector<20x80xf32>, vector<2x80xf32> -> vector<2x80xf32>
    %203 = arith.addf %201, %202 : vector<2x80xf32>
    %204 = vector.extract_strided_slice %203 {offsets = [0, 0], sizes = [2, 60], strides = [1, 1]} : vector<2x80xf32> to vector<2x60xf32>
    %205 = arith.negf %204 : vector<2x60xf32>
    %206 = math.exp %205 : vector<2x60xf32>
    %cst_30 = arith.constant 1.000000e+00 : f32
    %207 = vector.broadcast %cst_30 : f32 to vector<2x60xf32>
    %208 = arith.addf %207, %206 : vector<2x60xf32>
    %209 = arith.divf %207, %208 : vector<2x60xf32>
    %210 = vector.extract_strided_slice %203 {offsets = [0, 60], sizes = [2, 20], strides = [1, 1]} : vector<2x80xf32> to vector<2x20xf32>
    %211 = math.tanh %210 : vector<2x20xf32>
    %212 = vector.extract_strided_slice %209 {offsets = [0, 0], sizes = [2, 20], strides = [1, 1]} : vector<2x60xf32> to vector<2x20xf32>
    %213 = vector.extract_strided_slice %209 {offsets = [0, 20], sizes = [2, 20], strides = [1, 1]} : vector<2x60xf32> to vector<2x20xf32>
    %214 = vector.extract_strided_slice %209 {offsets = [0, 40], sizes = [2, 20], strides = [1, 1]} : vector<2x60xf32> to vector<2x20xf32>
    %215 = arith.mulf %213, %179 : vector<2x20xf32>
    %216 = arith.mulf %212, %211 : vector<2x20xf32>
    %217 = arith.addf %215, %216 : vector<2x20xf32>
    %218 = math.tanh %217 : vector<2x20xf32>
    %219 = arith.mulf %214, %218 : vector<2x20xf32>
    %220 = tpu.concatenate %219, %200 in 1 : vector<2x20xf32>, vector<2x20xf32> -> vector<2x40xf32>
    %cst_31 = arith.constant dense<0.000000e+00> : vector<2x80xf32>
    %221 = tpu.matmul %220, %2, %cst_31 {dimension_numbers = #tpu.dot_dimension_numbers<[1], [0], [0], [1], [0, 0, 1, 1], [], []>} : vector<2x40xf32>, vector<40x80xf32>, vector<2x80xf32> -> vector<2x80xf32>
    %222 = arith.addf %221, %5 : vector<2x80xf32>
    %223 = vector.extract_strided_slice %222 {offsets = [0, 0], sizes = [2, 60], strides = [1, 1]} : vector<2x80xf32> to vector<2x60xf32>
    %224 = arith.negf %223 : vector<2x60xf32>
    %225 = math.exp %224 : vector<2x60xf32>
    %cst_32 = arith.constant 1.000000e+00 : f32
    %226 = vector.broadcast %cst_32 : f32 to vector<2x60xf32>
    %227 = arith.addf %226, %225 : vector<2x60xf32>
    %228 = arith.divf %226, %227 : vector<2x60xf32>
    %229 = vector.extract_strided_slice %222 {offsets = [0, 60], sizes = [2, 20], strides = [1, 1]} : vector<2x80xf32> to vector<2x20xf32>
    %230 = math.tanh %229 : vector<2x20xf32>
    %231 = vector.extract_strided_slice %228 {offsets = [0, 0], sizes = [2, 20], strides = [1, 1]} : vector<2x60xf32> to vector<2x20xf32>
    %232 = vector.extract_strided_slice %228 {offsets = [0, 20], sizes = [2, 20], strides = [1, 1]} : vector<2x60xf32> to vector<2x20xf32>
    %233 = vector.extract_strided_slice %228 {offsets = [0, 40], sizes = [2, 20], strides = [1, 1]} : vector<2x60xf32> to vector<2x20xf32>
    %234 = arith.mulf %232, %198 : vector<2x20xf32>
    %235 = arith.mulf %231, %230 : vector<2x20xf32>
    %236 = arith.addf %234, %235 : vector<2x20xf32>
    %237 = math.tanh %236 : vector<2x20xf32>
    %238 = arith.mulf %233, %237 : vector<2x20xf32>
    %239 = vector.extract_strided_slice %9 {offsets = [12, 0], sizes = [2, 80], strides = [1, 1]} : vector<16x80xf32> to vector<2x80xf32>
    %cst_33 = arith.constant dense<0.000000e+00> : vector<2x80xf32>
    %240 = tpu.matmul %219, %1, %cst_33 {dimension_numbers = #tpu.dot_dimension_numbers<[1], [0], [0], [1], [0, 0, 1, 1], [], []>} : vector<2x20xf32>, vector<20x80xf32>, vector<2x80xf32> -> vector<2x80xf32>
    %241 = arith.addf %239, %240 : vector<2x80xf32>
    %242 = vector.extract_strided_slice %241 {offsets = [0, 0], sizes = [2, 60], strides = [1, 1]} : vector<2x80xf32> to vector<2x60xf32>
    %243 = arith.negf %242 : vector<2x60xf32>
    %244 = math.exp %243 : vector<2x60xf32>
    %cst_34 = arith.constant 1.000000e+00 : f32
    %245 = vector.broadcast %cst_34 : f32 to vector<2x60xf32>
    %246 = arith.addf %245, %244 : vector<2x60xf32>
    %247 = arith.divf %245, %246 : vector<2x60xf32>
    %248 = vector.extract_strided_slice %241 {offsets = [0, 60], sizes = [2, 20], strides = [1, 1]} : vector<2x80xf32> to vector<2x20xf32>
    %249 = math.tanh %248 : vector<2x20xf32>
    %250 = vector.extract_strided_slice %247 {offsets = [0, 0], sizes = [2, 20], strides = [1, 1]} : vector<2x60xf32> to vector<2x20xf32>
    %251 = vector.extract_strided_slice %247 {offsets = [0, 20], sizes = [2, 20], strides = [1, 1]} : vector<2x60xf32> to vector<2x20xf32>
    %252 = vector.extract_strided_slice %247 {offsets = [0, 40], sizes = [2, 20], strides = [1, 1]} : vector<2x60xf32> to vector<2x20xf32>
    %253 = arith.mulf %251, %217 : vector<2x20xf32>
    %254 = arith.mulf %250, %249 : vector<2x20xf32>
    %255 = arith.addf %253, %254 : vector<2x20xf32>
    %256 = math.tanh %255 : vector<2x20xf32>
    %257 = arith.mulf %252, %256 : vector<2x20xf32>
    %258 = tpu.concatenate %257, %238 in 1 : vector<2x20xf32>, vector<2x20xf32> -> vector<2x40xf32>
    %cst_35 = arith.constant dense<0.000000e+00> : vector<2x80xf32>
    %259 = tpu.matmul %258, %2, %cst_35 {dimension_numbers = #tpu.dot_dimension_numbers<[1], [0], [0], [1], [0, 0, 1, 1], [], []>} : vector<2x40xf32>, vector<40x80xf32>, vector<2x80xf32> -> vector<2x80xf32>
    %260 = arith.addf %259, %5 : vector<2x80xf32>
    %261 = vector.extract_strided_slice %260 {offsets = [0, 0], sizes = [2, 60], strides = [1, 1]} : vector<2x80xf32> to vector<2x60xf32>
    %262 = arith.negf %261 : vector<2x60xf32>
    %263 = math.exp %262 : vector<2x60xf32>
    %cst_36 = arith.constant 1.000000e+00 : f32
    %264 = vector.broadcast %cst_36 : f32 to vector<2x60xf32>
    %265 = arith.addf %264, %263 : vector<2x60xf32>
    %266 = arith.divf %264, %265 : vector<2x60xf32>
    %267 = vector.extract_strided_slice %260 {offsets = [0, 60], sizes = [2, 20], strides = [1, 1]} : vector<2x80xf32> to vector<2x20xf32>
    %268 = math.tanh %267 : vector<2x20xf32>
    %269 = vector.extract_strided_slice %266 {offsets = [0, 0], sizes = [2, 20], strides = [1, 1]} : vector<2x60xf32> to vector<2x20xf32>
    %270 = vector.extract_strided_slice %266 {offsets = [0, 20], sizes = [2, 20], strides = [1, 1]} : vector<2x60xf32> to vector<2x20xf32>
    %271 = vector.extract_strided_slice %266 {offsets = [0, 40], sizes = [2, 20], strides = [1, 1]} : vector<2x60xf32> to vector<2x20xf32>
    %272 = arith.mulf %270, %236 : vector<2x20xf32>
    %273 = arith.mulf %269, %268 : vector<2x20xf32>
    %274 = arith.addf %272, %273 : vector<2x20xf32>
    %275 = math.tanh %274 : vector<2x20xf32>
    %276 = arith.mulf %271, %275 : vector<2x20xf32>
    %277 = vector.extract_strided_slice %9 {offsets = [14, 0], sizes = [2, 80], strides = [1, 1]} : vector<16x80xf32> to vector<2x80xf32>
    %cst_37 = arith.constant dense<0.000000e+00> : vector<2x80xf32>
    %278 = tpu.matmul %257, %1, %cst_37 {dimension_numbers = #tpu.dot_dimension_numbers<[1], [0], [0], [1], [0, 0, 1, 1], [], []>} : vector<2x20xf32>, vector<20x80xf32>, vector<2x80xf32> -> vector<2x80xf32>
    %279 = arith.addf %277, %278 : vector<2x80xf32>
    %280 = vector.extract_strided_slice %279 {offsets = [0, 0], sizes = [2, 60], strides = [1, 1]} : vector<2x80xf32> to vector<2x60xf32>
    %281 = arith.negf %280 : vector<2x60xf32>
    %282 = math.exp %281 : vector<2x60xf32>
    %cst_38 = arith.constant 1.000000e+00 : f32
    %283 = vector.broadcast %cst_38 : f32 to vector<2x60xf32>
    %284 = arith.addf %283, %282 : vector<2x60xf32>
    %285 = arith.divf %283, %284 : vector<2x60xf32>
    %286 = vector.extract_strided_slice %279 {offsets = [0, 60], sizes = [2, 20], strides = [1, 1]} : vector<2x80xf32> to vector<2x20xf32>
    %287 = math.tanh %286 : vector<2x20xf32>
    %288 = vector.extract_strided_slice %285 {offsets = [0, 0], sizes = [2, 20], strides = [1, 1]} : vector<2x60xf32> to vector<2x20xf32>
    %289 = vector.extract_strided_slice %285 {offsets = [0, 20], sizes = [2, 20], strides = [1, 1]} : vector<2x60xf32> to vector<2x20xf32>
    %290 = vector.extract_strided_slice %285 {offsets = [0, 40], sizes = [2, 20], strides = [1, 1]} : vector<2x60xf32> to vector<2x20xf32>
    %291 = arith.mulf %289, %255 : vector<2x20xf32>
    %292 = arith.mulf %288, %287 : vector<2x20xf32>
    %293 = arith.addf %291, %292 : vector<2x20xf32>
    %294 = math.tanh %293 : vector<2x20xf32>
    %295 = arith.mulf %290, %294 : vector<2x20xf32>
    %296 = tpu.concatenate %295, %276 in 1 : vector<2x20xf32>, vector<2x20xf32> -> vector<2x40xf32>
    %cst_39 = arith.constant dense<0.000000e+00> : vector<2x80xf32>
    %297 = tpu.matmul %296, %2, %cst_39 {dimension_numbers = #tpu.dot_dimension_numbers<[1], [0], [0], [1], [0, 0, 1, 1], [], []>} : vector<2x40xf32>, vector<40x80xf32>, vector<2x80xf32> -> vector<2x80xf32>
    %298 = arith.addf %297, %5 : vector<2x80xf32>
    %299 = vector.extract_strided_slice %298 {offsets = [0, 0], sizes = [2, 60], strides = [1, 1]} : vector<2x80xf32> to vector<2x60xf32>
    %300 = arith.negf %299 : vector<2x60xf32>
    %301 = math.exp %300 : vector<2x60xf32>
    %cst_40 = arith.constant 1.000000e+00 : f32
    %302 = vector.broadcast %cst_40 : f32 to vector<2x60xf32>
    %303 = arith.addf %302, %301 : vector<2x60xf32>
    %304 = arith.divf %302, %303 : vector<2x60xf32>
    %305 = vector.extract_strided_slice %298 {offsets = [0, 60], sizes = [2, 20], strides = [1, 1]} : vector<2x80xf32> to vector<2x20xf32>
    %306 = math.tanh %305 : vector<2x20xf32>
    %307 = vector.extract_strided_slice %304 {offsets = [0, 0], sizes = [2, 20], strides = [1, 1]} : vector<2x60xf32> to vector<2x20xf32>
    %308 = vector.extract_strided_slice %304 {offsets = [0, 20], sizes = [2, 20], strides = [1, 1]} : vector<2x60xf32> to vector<2x20xf32>
    %309 = vector.extract_strided_slice %304 {offsets = [0, 40], sizes = [2, 20], strides = [1, 1]} : vector<2x60xf32> to vector<2x20xf32>
    %310 = arith.mulf %308, %274 : vector<2x20xf32>
    %311 = arith.mulf %307, %306 : vector<2x20xf32>
    %312 = arith.addf %310, %311 : vector<2x20xf32>
    %313 = math.tanh %312 : vector<2x20xf32>
    %314 = arith.mulf %309, %313 : vector<2x20xf32>
    %cst_41 = arith.constant dense<0.000000e+00> : vector<2x80xf32>
    %315 = tpu.matmul %314, %6, %cst_41 {dimension_numbers = #tpu.dot_dimension_numbers<[1], [0], [0], [1], [0, 0, 1, 1], [], []>} : vector<2x20xf32>, vector<20x80xf32>, vector<2x80xf32> -> vector<2x80xf32>
    %316 = vector.broadcast %7 : vector<1x80xf32> to vector<2x80xf32>
    %317 = arith.addf %315, %316 : vector<2x80xf32>
    %318 = vector.extract_strided_slice %317 {offsets = [0, 0], sizes = [2, 2], strides = [1, 1]} : vector<2x80xf32> to vector<2x2xf32>
    %c0_42 = arith.constant 0 : index
    %c0_43 = arith.constant 0 : index
    %319 = vector.load %arg2[%c0_42, %c0_43] : memref<2x2xf32, #tpu.memory_space<vmem>>, vector<2x2xf32>
    tpu.vector_store %arg2[%c0_42, %c0_43], %318 {strides = array<i32>} : memref<2x2xf32, #tpu.memory_space<vmem>>, vector<2x2xf32>,
    return
  }
}

</mosaic_0001>

<llo_original>
// kernel: tpu_custom_call.1
$region0: #{tpu_custom_call.1}
  #allocation0 [shape = 'u32[]', space=smem, size = 0x4, offset = 0x4, fixed_abs, tag = 'smem constant byte address 0x4 - core index']
  #allocation1 [shape = 'u32[144,128]{1,0:T(1,128)}', space=vmem, size = 0x12000, scoped, tag = 'internal scratch']
  %s0 = inlined_call_operand.vmem [shape: f32[16,16], index: 0, kind: input, shape index: {}]
  %s1 = inlined_call_operand.vmem [shape: f32[120,80], index: 1, kind: input, shape index: {}]
  %s2 = inlined_call_operand.hbm [shape: f32[2,2], index: 2, kind: output, shape index: {}]
  %s3 = sld [smem:[#allocation0]]
  $region18: #{tpu_custom_call.1} parent=0
    _
  %s5 = ssub.s32 1, %s3
  %s6 = scalar_select 0, %s5, %s3
  $region1: #{tpu_custom_call.1} parent=0
    #allocation2 [shape = 'u8[1024]{0}', space=vmem, size = 0x400, scoped, tag = 'output window, operand 0, single buffered']
    #allocation3 [shape = 's32[1]{0}', space=sflag, size = 0x4, scoped, tag = 'scoped memory for tpu_custom_call.1']
    %7 = vsyncpa [#allocation3], 0
    // Predicated region
    $region2: #{tpu_custom_call.1} parent=1 // pred_check
      _
    $region3: #{tpu_custom_call.1} parent=1 // pred_check_branch
      %9 = sbr.rel (0) target = $region5
    $region4: #{tpu_custom_call.1} parent=1 // pred_region
      _
    $region5: #{tpu_custom_call.1} parent=1 // pred_fallthru
      _
    // Predicated region
    $region6: #{tpu_custom_call.1} parent=1 // pred_check
      _
    $region7: #{tpu_custom_call.1} parent=1 // pred_check_branch
      %11 = sbr.rel (0) target = $region9
    $region8: #{tpu_custom_call.1} parent=1 // pred_region
      _
    $region9: #{tpu_custom_call.1} parent=1 // pred_fallthru
      _
    %v12 = vld [vmem:[%s1] sm:$0xff]
    %v13 = vld [vmem:[%s1 + $0x8] sm:$0xff]
    %v14 = vld [vmem:[%s1 + $0x10] sm:$0xff]
    %v15 = vld [vmem:[%s1 + $0x18] sm:$0xff]
    %v16 = vld [vmem:[%s1 + $0x20] sm:$0xf]
    %v17 = vld [vmem:[%s1 + $0x28] sm:$0xff]
    %v18 = vld [vmem:[%s1 + $0x30] sm:$0xff]
    %v19 = vld [vmem:[%s1 + $0x38] sm:$0xff]
    %v20 = vld [vmem:[%s1 + $0x40] sm:$0xff]
    %v21 = vld [vmem:[%s1 + $0x48] sm:$0xff]
    %v22 = vld [vmem:[%s1 + $0x50] sm:$0x1]
    %v23 = vlaneseq
    %v24 = vshrl.u32 %v23, 7
    %v25 = vsub.s32 0, %v24
    %v26 = vrot.slane %v22, %v25
    %v27 = vld [vmem:[%s1 + $0x58] sm:$0xff]
    %v28 = vld [vmem:[%s1 + $0x60] sm:$0xff]
    %v29 = vld [vmem:[%s1 + $0x68] sm:$0xf]
    %v30 = vld [vmem:[%s1 + $0x70] sm:$0x1]
    %v31 = vld [vmem:[%s0] sm:$0xff]
    %v32 = vld [vmem:[%s0 + $0x8] sm:$0xff]
    %vm33 = vcmask 130048
    %v35 = vsel %vm33, %v31, 0
    %v38 = vsel %vm33, %v32, 0
    %40 = vmatprep.subr.mxu0 0.0
    %41 = vmatpush1.msra.mxu0 %v12
    %42 = vmatprep.subr.mxu0 0.0
    %43 = vmatpush1.msra.mxu0 %v13
    %44 = vmatprep.subr.mxu0 0.0
    %45 = vmatpush1.msra.mxu0 0.0
    %46 = vmatprep.subr.mxu0 0.0
    %47 = vmatpush1.msra.mxu0 0.0
    %48 = vmatprep.subr.mxu0 0.0
    %49 = vmatpush1.msra.mxu0 0.0
    %50 = vmatprep.subr.mxu0 0.0
    %51 = vmatpush1.msra.mxu0 0.0
    %52 = vmatprep.subr.mxu0 0.0
    %53 = vmatpush1.msra.mxu0 0.0
    %54 = vmatprep.subr.mxu0 0.0
    %55 = vmatpush1.msra.mxu0 0.0
    %56 = vmatprep.subr.mxu0 0.0
    %57 = vmatpush1.msra.mxu0 0.0
    %58 = vmatprep.subr.mxu0 0.0
    %59 = vmatpush1.msra.mxu0 0.0
    %60 = vmatprep.subr.mxu0 0.0
    %61 = vmatpush1.msra.mxu0 0.0
    %62 = vmatprep.subr.mxu0 0.0
    %63 = vmatpush1.msra.mxu0 0.0
    %64 = vmatprep.subr.mxu0 0.0
    %65 = vmatpush1.msra.mxu0 0.0
    %66 = vmatprep.subr.mxu0 0.0
    %67 = vmatpush1.msra.mxu0 0.0
    %68 = vmatprep.subr.mxu0 0.0
    %69 = vmatpush1.msra.mxu0 0.0
    %70 = vmatprep.subr.mxu0 0.0
    %71 = vmatpush1.msra.mxu0 0.0
    %72 = vmatprep.subr.mxu0 0.0
    %73 = vmatpush1.msra.mxu0 0.0
    %74 = vmatprep.subr.mxu0 0.0
    %75 = vmatpush1.msra.mxu0 0.0
    %76 = vmatprep.subr.mxu0 0.0
    %77 = vmatpush1.msra.mxu0 0.0
    %78 = vmatprep.subr.mxu0 0.0
    %79 = vmatpush1.msra.mxu0 0.0
    %80 = vmatprep.subr.mxu0 0.0
    %81 = vmatpush1.msra.mxu0 0.0
    %82 = vmatprep.subr.mxu0 0.0
    %83 = vmatpush1.msra.mxu0 0.0
    %84 = vmatprep.subr.mxu0 0.0
    %85 = vmatpush1.msra.mxu0 0.0
    %86 = vmatprep.subr.mxu0 0.0
    %87 = vmatpush1.msra.mxu0 0.0
    %88 = vmatprep.subr.mxu0 0.0
    %89 = vmatpush1.msra.mxu0 0.0
    %90 = vmatprep.subr.mxu0 0.0
    %91 = vmatpush1.msra.mxu0 0.0
    %92 = vmatprep.subr.mxu0 0.0
    %93 = vmatpush1.msra.mxu0 0.0
    %94 = vmatprep.subr.mxu0 0.0
    %95 = vmatpush1.msra.mxu0 0.0
    %96 = vmatprep.subr.mxu0 0.0
    %97 = vmatpush1.msra.mxu0 0.0
    %98 = vmatprep.subr.mxu0 0.0
    %99 = vmatpush1.msra.mxu0 0.0
    %100 = vmatprep.subr.mxu0 0.0
    %101 = vmatpush1.msra.mxu0 0.0
    %102 = vmatprep.subr.mxu0 0.0
    %103 = vmatpush1.msra.mxu0 0.0
    %104 = vmatprep.mubr.f32.mxu0 0.0
    %105 = vmatmul.mubr.f32.gmra.mrb[0].mxu0 %v35
    %v106 = vpop.f32.mrb[0].mxu0
    %v107 = vadd.f32 0.0, %v106
    %v108 = vpop.f32.mrb[0].mxu0
    %109 = vmatprep.mubr.f32.mxu0 0.0
    %110 = vmatmul.mubr.f32.gmra.mrb[0].mxu0 %v38
    %v111 = vpop.f32.mrb[0].mxu0
    %v112 = vadd.f32 0.0, %v111
    %v113 = vpop.f32.mrb[0].mxu0
    %114 = vdwg.mxu0
    %vm115 = vcmask 162816
    %v117 = vsel %vm115, 0.0, 0
    %vm119 = vcmask 1043456
    %v121 = vsel %vm119, %v16, 0
    %123 = vmatprep.subr.mxu0 0.0
    %124 = vmatpush1.msra.mxu0 %v14
    %125 = vmatprep.subr.mxu0 0.0
    %126 = vmatpush1.msra.mxu0 %v15
    %127 = vmatprep.subr.mxu0 0.0
    %128 = vmatpush1.msra.mxu0 %v121
    %129 = vmatprep.subr.mxu0 0.0
    %130 = vmatpush1.msra.mxu0 0.0
    %131 = vmatprep.subr.mxu0 0.0
    %132 = vmatpush1.msra.mxu0 0.0
    %133 = vmatprep.subr.mxu0 0.0
    %134 = vmatpush1.msra.mxu0 0.0
    %135 = vmatprep.subr.mxu0 0.0
    %136 = vmatpush1.msra.mxu0 0.0
    %137 = vmatprep.subr.mxu0 0.0
    %138 = vmatpush1.msra.mxu0 0.0
    %139 = vmatprep.subr.mxu0 0.0
    %140 = vmatpush1.msra.mxu0 0.0
    %141 = vmatprep.subr.mxu0 0.0
    %142 = vmatpush1.msra.mxu0 0.0
    %143 = vmatprep.subr.mxu0 0.0
    %144 = vmatpush1.msra.mxu0 0.0
    %145 = vmatprep.subr.mxu0 0.0
    %146 = vmatpush1.msra.mxu0 0.0
    %147 = vmatprep.subr.mxu0 0.0
    %148 = vmatpush1.msra.mxu0 0.0
    %149 = vmatprep.subr.mxu0 0.0
    %150 = vmatpush1.msra.mxu0 0.0
    %151 = vmatprep.subr.mxu0 0.0
    %152 = vmatpush1.msra.mxu0 0.0
    %153 = vmatprep.subr.mxu0 0.0
    %154 = vmatpush1.msra.mxu0 0.0
    %155 = vmatprep.subr.mxu0 0.0
    %156 = vmatpush1.msra.mxu0 0.0
    %157 = vmatprep.subr.mxu0 0.0
    %158 = vmatpush1.msra.mxu0 0.0
    %159 = vmatprep.subr.mxu0 0.0
    %160 = vmatpush1.msra.mxu0 0.0
    %161 = vmatprep.subr.mxu0 0.0
    %162 = vmatpush1.msra.mxu0 0.0
    %163 = vmatprep.subr.mxu0 0.0
    %164 = vmatpush1.msra.mxu0 0.0
    %165 = vmatprep.subr.mxu0 0.0
    %166 = vmatpush1.msra.mxu0 0.0
    %167 = vmatprep.subr.mxu0 0.0
    %168 = vmatpush1.msra.mxu0 0.0
    %169 = vmatprep.subr.mxu0 0.0
    %170 = vmatpush1.msra.mxu0 0.0
    %171 = vmatprep.subr.mxu0 0.0
    %172 = vmatpush1.msra.mxu0 0.0
    %173 = vmatprep.subr.mxu0 0.0
    %174 = vmatpush1.msra.mxu0 0.0
    %175 = vmatprep.subr.mxu0 0.0
    %176 = vmatpush1.msra.mxu0 0.0
    %177 = vmatprep.subr.mxu0 0.0
    %178 = vmatpush1.msra.mxu0 0.0
    %179 = vmatprep.subr.mxu0 0.0
    %180 = vmatpush1.msra.mxu0 0.0
    %181 = vmatprep.subr.mxu0 0.0
    %182 = vmatpush1.msra.mxu0 0.0
    %183 = vmatprep.subr.mxu0 0.0
    %184 = vmatpush1.msra.mxu0 0.0
    %185 = vmatprep.subr.mxu0 0.0
    %186 = vmatpush1.msra.mxu0 0.0
    %187 = vmatprep.mubr.f32.mxu0 0.0
    %188 = vmatmul.mubr.f32.gmra.mrb[0].mxu0 %v117
    %v189 = vpop.f32.mrb[0].mxu0
    %v190 = vadd.f32 0.0, %v189
    %v191 = vpop.f32.mrb[0].mxu0
    %192 = vdwg.mxu0
    %v193 = vadd.f32 %v107, %v190
    %v194 = vxor.u32 %v193, 2147483648
    %v195 = vmul.f32 %v194, 1.442695
    %v196 = vpow.pop %v195
    %v197 = vadd.f32 %v196, 1.0
    %v198 = vrcp.pop %v197
    %v199 = vmul.f32 1.0, %v198
    %v200 = vtanh.pop %v193
    %v201 = vmul.f32 %v199, 0.0
    %203 = vrot.lane.b32.xlu0 %v200, 68
    %v204 = vpop.permute.xlu0 %203
    %v206 = vmul.f32 %v199, %v204
    %208 = vrot.lane.b32.xlu0 %v206, 20
    %v209 = vpop.permute.xlu0 %208
    %v211 = vadd.f32 %v201, %v209
    %v212 = vtanh.pop %v211
    %214 = vrot.lane.b32.xlu0 %v212, 20
    %v215 = vpop.permute.xlu0 %214
    %v217 = vmul.f32 %v199, %v215
    %219 = vrot.lane.b32.xlu0 %v217, 88
    %v220 = vpop.permute.xlu0 %219
    %v222 = vsel %vm115, %v220, 0.0
    %vm223 = vcmask 326656
    %v225 = vsel %vm223, %v222, 0
    %227 = vmatprep.subr.mxu0 0.0
    %228 = vmatpush1.msra.mxu0 %v17
    %229 = vmatprep.subr.mxu0 0.0
    %230 = vmatpush1.msra.mxu0 %v18
    %231 = vmatprep.subr.mxu0 0.0
    %232 = vmatpush1.msra.mxu0 %v19
    %233 = vmatprep.subr.mxu0 0.0
    %234 = vmatpush1.msra.mxu0 %v20
    %235 = vmatprep.subr.mxu0 0.0
    %236 = vmatpush1.msra.mxu0 %v21
    %237 = vmatprep.subr.mxu0 0.0
    %238 = vmatpush1.msra.mxu0 0.0
    %239 = vmatprep.subr.mxu0 0.0
    %240 = vmatpush1.msra.mxu0 0.0
    %241 = vmatprep.subr.mxu0 0.0
    %242 = vmatpush1.msra.mxu0 0.0
    %243 = vmatprep.subr.mxu0 0.0
    %244 = vmatpush1.msra.mxu0 0.0
    %245 = vmatprep.subr.mxu0 0.0
    %246 = vmatpush1.msra.mxu0 0.0
    %247 = vmatprep.subr.mxu0 0.0
    %248 = vmatpush1.msra.mxu0 0.0
    %249 = vmatprep.subr.mxu0 0.0
    %250 = vmatpush1.msra.mxu0 0.0
    %251 = vmatprep.subr.mxu0 0.0
    %252 = vmatpush1.msra.mxu0 0.0
    %253 = vmatprep.subr.mxu0 0.0
    %254 = vmatpush1.msra.mxu0 0.0
    %255 = vmatprep.subr.mxu0 0.0
    %256 = vmatpush1.msra.mxu0 0.0
    %257 = vmatprep.subr.mxu0 0.0
    %258 = vmatpush1.msra.mxu0 0.0
    %259 = vmatprep.subr.mxu0 0.0
    %260 = vmatpush1.msra.mxu0 0.0
    %261 = vmatprep.subr.mxu0 0.0
    %262 = vmatpush1.msra.mxu0 0.0
    %263 = vmatprep.subr.mxu0 0.0
    %264 = vmatpush1.msra.mxu0 0.0
    %265 = vmatprep.subr.mxu0 0.0
    %266 = vmatpush1.msra.mxu0 0.0
    %267 = vmatprep.subr.mxu0 0.0
    %268 = vmatpush1.msra.mxu0 0.0
    %269 = vmatprep.subr.mxu0 0.0
    %270 = vmatpush1.msra.mxu0 0.0
    %271 = vmatprep.subr.mxu0 0.0
    %272 = vmatpush1.msra.mxu0 0.0
    %273 = vmatprep.subr.mxu0 0.0
    %274 = vmatpush1.msra.mxu0 0.0
    %275 = vmatprep.subr.mxu0 0.0
    %276 = vmatpush1.msra.mxu0 0.0
    %277 = vmatprep.subr.mxu0 0.0
    %278 = vmatpush1.msra.mxu0 0.0
    %279 = vmatprep.subr.mxu0 0.0
    %280 = vmatpush1.msra.mxu0 0.0
    %281 = vmatprep.subr.mxu0 0.0
    %282 = vmatpush1.msra.mxu0 0.0
    %283 = vmatprep.subr.mxu0 0.0
    %284 = vmatpush1.msra.mxu0 0.0
    %285 = vmatprep.subr.mxu0 0.0
    %286 = vmatpush1.msra.mxu0 0.0
    %287 = vmatprep.subr.mxu0 0.0
    %288 = vmatpush1.msra.mxu0 0.0
    %289 = vmatprep.subr.mxu0 0.0
    %290 = vmatpush1.msra.mxu0 0.0
    %291 = vmatprep.mubr.f32.mxu0 0.0
    %292 = vmatmul.mubr.f32.gmra.mrb[0].mxu0 %v225
    %v293 = vpop.f32.mrb[0].mxu0
    %v294 = vadd.f32 %v26, %v293
    %v295 = vpop.f32.mrb[0].mxu0
    %296 = vdwg.mxu0
    %v297 = vxor.u32 %v294, 2147483648
    %v298 = vmul.f32 %v297, 1.442695
    %v299 = vpow.pop %v298
    %v300 = vadd.f32 %v299, 1.0
    %v301 = vrcp.pop %v300
    %v302 = vmul.f32 1.0, %v301
    %v303 = vtanh.pop %v294
    %v304 = vmul.f32 %v302, 0.0
    %306 = vrot.lane.b32.xlu0 %v303, 68
    %v307 = vpop.permute.xlu0 %306
    %v309 = vmul.f32 %v302, %v307
    %311 = vrot.lane.b32.xlu0 %v309, 20
    %v312 = vpop.permute.xlu0 %311
    %v314 = vadd.f32 %v304, %v312
    %v315 = vtanh.pop %v314
    %317 = vrot.lane.b32.xlu0 %v315, 20
    %v318 = vpop.permute.xlu0 %317
    %v320 = vmul.f32 %v302, %v318
    %v321 = vsel %vm115, %v220, 0
    %323 = vmatprep.subr.mxu0 0.0
    %324 = vmatpush1.msra.mxu0 %v14
    %325 = vmatprep.subr.mxu0 0.0
    %326 = vmatpush1.msra.mxu0 %v15
    %327 = vmatprep.subr.mxu0 0.0
    %328 = vmatpush1.msra.mxu0 %v121
    %329 = vmatprep.subr.mxu0 0.0
    %330 = vmatpush1.msra.mxu0 0.0
    %331 = vmatprep.subr.mxu0 0.0
    %332 = vmatpush1.msra.mxu0 0.0
    %333 = vmatprep.subr.mxu0 0.0
    %334 = vmatpush1.msra.mxu0 0.0
    %335 = vmatprep.subr.mxu0 0.0
    %336 = vmatpush1.msra.mxu0 0.0
    %337 = vmatprep.subr.mxu0 0.0
    %338 = vmatpush1.msra.mxu0 0.0
    %339 = vmatprep.subr.mxu0 0.0
    %340 = vmatpush1.msra.mxu0 0.0
    %341 = vmatprep.subr.mxu0 0.0
    %342 = vmatpush1.msra.mxu0 0.0
    %343 = vmatprep.subr.mxu0 0.0
    %344 = vmatpush1.msra.mxu0 0.0
    %345 = vmatprep.subr.mxu0 0.0
    %346 = vmatpush1.msra.mxu0 0.0
    %347 = vmatprep.subr.mxu0 0.0
    %348 = vmatpush1.msra.mxu0 0.0
    %349 = vmatprep.subr.mxu0 0.0
    %350 = vmatpush1.msra.mxu0 0.0
    %351 = vmatprep.subr.mxu0 0.0
    %352 = vmatpush1.msra.mxu0 0.0
    %353 = vmatprep.subr.mxu0 0.0
    %354 = vmatpush1.msra.mxu0 0.0
    %355 = vmatprep.subr.mxu0 0.0
    %356 = vmatpush1.msra.mxu0 0.0
    %357 = vmatprep.subr.mxu0 0.0
    %358 = vmatpush1.msra.mxu0 0.0
    %359 = vmatprep.subr.mxu0 0.0
    %360 = vmatpush1.msra.mxu0 0.0
    %361 = vmatprep.subr.mxu0 0.0
    %362 = vmatpush1.msra.mxu0 0.0
    %363 = vmatprep.subr.mxu0 0.0
    %364 = vmatpush1.msra.mxu0 0.0
    %365 = vmatprep.subr.mxu0 0.0
    %366 = vmatpush1.msra.mxu0 0.0
    %367 = vmatprep.subr.mxu0 0.0
    %368 = vmatpush1.msra.mxu0 0.0
    %369 = vmatprep.subr.mxu0 0.0
    %370 = vmatpush1.msra.mxu0 0.0
    %371 = vmatprep.subr.mxu0 0.0
    %372 = vmatpush1.msra.mxu0 0.0
    %373 = vmatprep.subr.mxu0 0.0
    %374 = vmatpush1.msra.mxu0 0.0
    %375 = vmatprep.subr.mxu0 0.0
    %376 = vmatpush1.msra.mxu0 0.0
    %377 = vmatprep.subr.mxu0 0.0
    %378 = vmatpush1.msra.mxu0 0.0
    %379 = vmatprep.subr.mxu0 0.0
    %380 = vmatpush1.msra.mxu0 0.0
    %381 = vmatprep.subr.mxu0 0.0
    %382 = vmatpush1.msra.mxu0 0.0
    %383 = vmatprep.subr.mxu0 0.0
    %384 = vmatpush1.msra.mxu0 0.0
    %385 = vmatprep.subr.mxu0 0.0
    %386 = vmatpush1.msra.mxu0 0.0
    %387 = vmatprep.mubr.f32.mxu0 0.0
    %388 = vmatmul.mubr.f32.gmra.mrb[0].mxu0 %v321
    %v389 = vpop.f32.mrb[0].mxu0
    %v390 = vadd.f32 0.0, %v389
    %v391 = vpop.f32.mrb[0].mxu0
    %392 = vdwg.mxu0
    %v394 = vrot.slane %v390, 6
    %v396 = vadd.f32 %v107, %v394
    %v397 = vxor.u32 %v396, 2147483648
    %v398 = vmul.f32 %v397, 1.442695
    %v399 = vpow.pop %v398
    %v400 = vadd.f32 %v399, 1.0
    %v401 = vrcp.pop %v400
    %v402 = vmul.f32 1.0, %v401
    %v403 = vtanh.pop %v396
    %v405 = vrot.slane %v211, 6
    %v407 = vmul.f32 %v402, %v405
    %409 = vrot.lane.b32.xlu0 %v403, 68
    %v410 = vpop.permute.xlu0 %409
    %v412 = vmul.f32 %v402, %v410
    %414 = vrot.lane.b32.xlu0 %v412, 20
    %v415 = vpop.permute.xlu0 %414
    %v417 = vadd.f32 %v407, %v415
    %v418 = vtanh.pop %v417
    %420 = vrot.lane.b32.xlu0 %v418, 20
    %v421 = vpop.permute.xlu0 %420
    %v423 = vmul.f32 %v402, %v421
    %425 = vrot.lane.b32.xlu0 %v423, 88
    %v426 = vpop.permute.xlu0 %425
    %v429 = vrot.slane %v320, 6
    %430 = vrot.lane.b32.xlu0 %v429, 108
    %v431 = vpop.permute.xlu0 %430
    %v433 = vsel %vm115, %v426, %v431
    %v435 = vrot.slane %v433, 2
    %v436 = vsel %vm223, %v435, 0
    %438 = vmatprep.subr.mxu0 0.0
    %439 = vmatpush1.msra.mxu0 %v17
    %440 = vmatprep.subr.mxu0 0.0
    %441 = vmatpush1.msra.mxu0 %v18
    %442 = vmatprep.subr.mxu0 0.0
    %443 = vmatpush1.msra.mxu0 %v19
    %444 = vmatprep.subr.mxu0 0.0
    %445 = vmatpush1.msra.mxu0 %v20
    %446 = vmatprep.subr.mxu0 0.0
    %447 = vmatpush1.msra.mxu0 %v21
    %448 = vmatprep.subr.mxu0 0.0
    %449 = vmatpush1.msra.mxu0 0.0
    %450 = vmatprep.subr.mxu0 0.0
    %451 = vmatpush1.msra.mxu0 0.0
    %452 = vmatprep.subr.mxu0 0.0
    %453 = vmatpush1.msra.mxu0 0.0
    %454 = vmatprep.subr.mxu0 0.0
    %455 = vmatpush1.msra.mxu0 0.0
    %456 = vmatprep.subr.mxu0 0.0
    %457 = vmatpush1.msra.mxu0 0.0
    %458 = vmatprep.subr.mxu0 0.0
    %459 = vmatpush1.msra.mxu0 0.0
    %460 = vmatprep.subr.mxu0 0.0
    %461 = vmatpush1.msra.mxu0 0.0
    %462 = vmatprep.subr.mxu0 0.0
    %463 = vmatpush1.msra.mxu0 0.0
    %464 = vmatprep.subr.mxu0 0.0
    %465 = vmatpush1.msra.mxu0 0.0
    %466 = vmatprep.subr.mxu0 0.0
    %467 = vmatpush1.msra.mxu0 0.0
    %468 = vmatprep.subr.mxu0 0.0
    %469 = vmatpush1.msra.mxu0 0.0
    %470 = vmatprep.subr.mxu0 0.0
    %471 = vmatpush1.msra.mxu0 0.0
    %472 = vmatprep.subr.mxu0 0.0
    %473 = vmatpush1.msra.mxu0 0.0
    %474 = vmatprep.subr.mxu0 0.0
    %475 = vmatpush1.msra.mxu0 0.0
    %476 = vmatprep.subr.mxu0 0.0
    %477 = vmatpush1.msra.mxu0 0.0
    %478 = vmatprep.subr.mxu0 0.0
    %479 = vmatpush1.msra.mxu0 0.0
    %480 = vmatprep.subr.mxu0 0.0
    %481 = vmatpush1.msra.mxu0 0.0
    %482 = vmatprep.subr.mxu0 0.0
    %483 = vmatpush1.msra.mxu0 0.0
    %484 = vmatprep.subr.mxu0 0.0
    %485 = vmatpush1.msra.mxu0 0.0
    %486 = vmatprep.subr.mxu0 0.0
    %487 = vmatpush1.msra.mxu0 0.0
    %488 = vmatprep.subr.mxu0 0.0
    %489 = vmatpush1.msra.mxu0 0.0
    %490 = vmatprep.subr.mxu0 0.0
    %491 = vmatpush1.msra.mxu0 0.0
    %492 = vmatprep.subr.mxu0 0.0
    %493 = vmatpush1.msra.mxu0 0.0
    %494 = vmatprep.subr.mxu0 0.0
    %495 = vmatpush1.msra.mxu0 0.0
    %496 = vmatprep.subr.mxu0 0.0
    %497 = vmatpush1.msra.mxu0 0.0
    %498 = vmatprep.subr.mxu0 0.0
    %499 = vmatpush1.msra.mxu0 0.0
    %500 = vmatprep.subr.mxu0 0.0
    %501 = vmatpush1.msra.mxu0 0.0
    %502 = vmatprep.mubr.f32.mxu0 0.0
    %503 = vmatmul.mubr.f32.gmra.mrb[0].mxu0 %v436
    %v504 = vpop.f32.mrb[0].mxu0
    %v505 = vadd.f32 %v26, %v504
    %v506 = vpop.f32.mrb[0].mxu0
    %507 = vdwg.mxu0
    %v508 = vxor.u32 %v505, 2147483648
    %v509 = vmul.f32 %v508, 1.442695
    %v510 = vpow.pop %v509
    %v511 = vadd.f32 %v510, 1.0
    %v512 = vrcp.pop %v511
    %v513 = vmul.f32 1.0, %v512
    %v514 = vtanh.pop %v505
    %v515 = vmul.f32 %v513, %v314
    %517 = vrot.lane.b32.xlu0 %v514, 68
    %v518 = vpop.permute.xlu0 %517
    %v520 = vmul.f32 %v513, %v518
    %522 = vrot.lane.b32.xlu0 %v520, 20
    %v523 = vpop.permute.xlu0 %522
    %v525 = vadd.f32 %v515, %v523
    %v526 = vtanh.pop %v525
    %528 = vrot.lane.b32.xlu0 %v526, 20
    %v529 = vpop.permute.xlu0 %528
    %v531 = vmul.f32 %v513, %v529
    %v532 = vrot.slane %v423, 2
    %533 = vrot.lane.b32.xlu0 %v532, 88
    %v534 = vpop.permute.xlu0 %533
    %v535 = vsel %vm115, %v534, 0
    %537 = vmatprep.subr.mxu0 0.0
    %538 = vmatpush1.msra.mxu0 %v14
    %539 = vmatprep.subr.mxu0 0.0
    %540 = vmatpush1.msra.mxu0 %v15
    %541 = vmatprep.subr.mxu0 0.0
    %542 = vmatpush1.msra.mxu0 %v121
    %543 = vmatprep.subr.mxu0 0.0
    %544 = vmatpush1.msra.mxu0 0.0
    %545 = vmatprep.subr.mxu0 0.0
    %546 = vmatpush1.msra.mxu0 0.0
    %547 = vmatprep.subr.mxu0 0.0
    %548 = vmatpush1.msra.mxu0 0.0
    %549 = vmatprep.subr.mxu0 0.0
    %550 = vmatpush1.msra.mxu0 0.0
    %551 = vmatprep.subr.mxu0 0.0
    %552 = vmatpush1.msra.mxu0 0.0
    %553 = vmatprep.subr.mxu0 0.0
    %554 = vmatpush1.msra.mxu0 0.0
    %555 = vmatprep.subr.mxu0 0.0
    %556 = vmatpush1.msra.mxu0 0.0
    %557 = vmatprep.subr.mxu0 0.0
    %558 = vmatpush1.msra.mxu0 0.0
    %559 = vmatprep.subr.mxu0 0.0
    %560 = vmatpush1.msra.mxu0 0.0
    %561 = vmatprep.subr.mxu0 0.0
    %562 = vmatpush1.msra.mxu0 0.0
    %563 = vmatprep.subr.mxu0 0.0
    %564 = vmatpush1.msra.mxu0 0.0
    %565 = vmatprep.subr.mxu0 0.0
    %566 = vmatpush1.msra.mxu0 0.0
    %567 = vmatprep.subr.mxu0 0.0
    %568 = vmatpush1.msra.mxu0 0.0
    %569 = vmatprep.subr.mxu0 0.0
    %570 = vmatpush1.msra.mxu0 0.0
    %571 = vmatprep.subr.mxu0 0.0
    %572 = vmatpush1.msra.mxu0 0.0
    %573 = vmatprep.subr.mxu0 0.0
    %574 = vmatpush1.msra.mxu0 0.0
    %575 = vmatprep.subr.mxu0 0.0
    %576 = vmatpush1.msra.mxu0 0.0
    %577 = vmatprep.subr.mxu0 0.0
    %578 = vmatpush1.msra.mxu0 0.0
    %579 = vmatprep.subr.mxu0 0.0
    %580 = vmatpush1.msra.mxu0 0.0
    %581 = vmatprep.subr.mxu0 0.0
    %582 = vmatpush1.msra.mxu0 0.0
    %583 = vmatprep.subr.mxu0 0.0
    %584 = vmatpush1.msra.mxu0 0.0
    %585 = vmatprep.subr.mxu0 0.0
    %586 = vmatpush1.msra.mxu0 0.0
    %587 = vmatprep.subr.mxu0 0.0
    %588 = vmatpush1.msra.mxu0 0.0
    %589 = vmatprep.subr.mxu0 0.0
    %590 = vmatpush1.msra.mxu0 0.0
    %591 = vmatprep.subr.mxu0 0.0
    %592 = vmatpush1.msra.mxu0 0.0
    %593 = vmatprep.subr.mxu0 0.0
    %594 = vmatpush1.msra.mxu0 0.0
    %595 = vmatprep.subr.mxu0 0.0
    %596 = vmatpush1.msra.mxu0 0.0
    %597 = vmatprep.subr.mxu0 0.0
    %598 = vmatpush1.msra.mxu0 0.0
    %599 = vmatprep.subr.mxu0 0.0
    %600 = vmatpush1.msra.mxu0 0.0
    %601 = vmatprep.mubr.f32.mxu0 0.0
    %602 = vmatmul.mubr.f32.gmra.mrb[0].mxu0 %v535
    %v603 = vpop.f32.mrb[0].mxu0
    %v604 = vadd.f32 0.0, %v603
    %v605 = vpop.f32.mrb[0].mxu0
    %606 = vdwg.mxu0
    %v608 = vrot.slane %v604, 4
    %v610 = vadd.f32 %v107, %v608
    %v611 = vxor.u32 %v610, 2147483648
    %v612 = vmul.f32 %v611, 1.442695
    %v613 = vpow.pop %v612
    %v614 = vadd.f32 %v613, 1.0
    %v615 = vrcp.pop %v614
    %v616 = vmul.f32 1.0, %v615
    %v617 = vtanh.pop %v610
    %v619 = vrot.slane %v417, 6
    %v621 = vmul.f32 %v616, %v619
    %623 = vrot.lane.b32.xlu0 %v617, 68
    %v624 = vpop.permute.xlu0 %623
    %v626 = vmul.f32 %v616, %v624
    %628 = vrot.lane.b32.xlu0 %v626, 20
    %v629 = vpop.permute.xlu0 %628
    %v631 = vadd.f32 %v621, %v629
    %v632 = vtanh.pop %v631
    %634 = vrot.lane.b32.xlu0 %v632, 20
    %v635 = vpop.permute.xlu0 %634
    %v637 = vmul.f32 %v616, %v635
    %639 = vrot.lane.b32.xlu0 %v637, 88
    %v640 = vpop.permute.xlu0 %639
    %v643 = vrot.slane %v531, 4
    %644 = vrot.lane.b32.xlu0 %v643, 108
    %v645 = vpop.permute.xlu0 %644
    %v647 = vsel %vm115, %v640, %v645
    %v649 = vrot.slane %v647, 4
    %v650 = vsel %vm223, %v649, 0
    %652 = vmatprep.subr.mxu0 0.0
    %653 = vmatpush1.msra.mxu0 %v17
    %654 = vmatprep.subr.mxu0 0.0
    %655 = vmatpush1.msra.mxu0 %v18
    %656 = vmatprep.subr.mxu0 0.0
    %657 = vmatpush1.msra.mxu0 %v19
    %658 = vmatprep.subr.mxu0 0.0
    %659 = vmatpush1.msra.mxu0 %v20
    %660 = vmatprep.subr.mxu0 0.0
    %661 = vmatpush1.msra.mxu0 %v21
    %662 = vmatprep.subr.mxu0 0.0
    %663 = vmatpush1.msra.mxu0 0.0
    %664 = vmatprep.subr.mxu0 0.0
    %665 = vmatpush1.msra.mxu0 0.0
    %666 = vmatprep.subr.mxu0 0.0
    %667 = vmatpush1.msra.mxu0 0.0
    %668 = vmatprep.subr.mxu0 0.0
    %669 = vmatpush1.msra.mxu0 0.0
    %670 = vmatprep.subr.mxu0 0.0
    %671 = vmatpush1.msra.mxu0 0.0
    %672 = vmatprep.subr.mxu0 0.0
    %673 = vmatpush1.msra.mxu0 0.0
    %674 = vmatprep.subr.mxu0 0.0
    %675 = vmatpush1.msra.mxu0 0.0
    %676 = vmatprep.subr.mxu0 0.0
    %677 = vmatpush1.msra.mxu0 0.0
    %678 = vmatprep.subr.mxu0 0.0
    %679 = vmatpush1.msra.mxu0 0.0
    %680 = vmatprep.subr.mxu0 0.0
    %681 = vmatpush1.msra.mxu0 0.0
    %682 = vmatprep.subr.mxu0 0.0
    %683 = vmatpush1.msra.mxu0 0.0
    %684 = vmatprep.subr.mxu0 0.0
    %685 = vmatpush1.msra.mxu0 0.0
    %686 = vmatprep.subr.mxu0 0.0
    %687 = vmatpush1.msra.mxu0 0.0
    %688 = vmatprep.subr.mxu0 0.0
    %689 = vmatpush1.msra.mxu0 0.0
    %690 = vmatprep.subr.mxu0 0.0
    %691 = vmatpush1.msra.mxu0 0.0
    %692 = vmatprep.subr.mxu0 0.0
    %693 = vmatpush1.msra.mxu0 0.0
    %694 = vmatprep.subr.mxu0 0.0
    %695 = vmatpush1.msra.mxu0 0.0
    %696 = vmatprep.subr.mxu0 0.0
    %697 = vmatpush1.msra.mxu0 0.0
    %698 = vmatprep.subr.mxu0 0.0
    %699 = vmatpush1.msra.mxu0 0.0
    %700 = vmatprep.subr.mxu0 0.0
    %701 = vmatpush1.msra.mxu0 0.0
    %702 = vmatprep.subr.mxu0 0.0
    %703 = vmatpush1.msra.mxu0 0.0
    %704 = vmatprep.subr.mxu0 0.0
    %705 = vmatpush1.msra.mxu0 0.0
    %706 = vmatprep.subr.mxu0 0.0
    %707 = vmatpush1.msra.mxu0 0.0
    %708 = vmatprep.subr.mxu0 0.0
    %709 = vmatpush1.msra.mxu0 0.0
    %710 = vmatprep.subr.mxu0 0.0
    %711 = vmatpush1.msra.mxu0 0.0
    %712 = vmatprep.subr.mxu0 0.0
    %713 = vmatpush1.msra.mxu0 0.0
    %714 = vmatprep.subr.mxu0 0.0
    %715 = vmatpush1.msra.mxu0 0.0
    %716 = vmatprep.mubr.f32.mxu0 0.0
    %717 = vmatmul.mubr.f32.gmra.mrb[0].mxu0 %v650
    %v718 = vpop.f32.mrb[0].mxu0
    %v719 = vadd.f32 %v26, %v718
    %v720 = vpop.f32.mrb[0].mxu0
    %721 = vdwg.mxu0
    %v722 = vxor.u32 %v719, 2147483648
    %v723 = vmul.f32 %v722, 1.442695
    %v724 = vpow.pop %v723
    %v725 = vadd.f32 %v724, 1.0
    %v726 = vrcp.pop %v725
    %v727 = vmul.f32 1.0, %v726
    %v728 = vtanh.pop %v719
    %v729 = vmul.f32 %v727, %v525
    %731 = vrot.lane.b32.xlu0 %v728, 68
    %v732 = vpop.permute.xlu0 %731
    %v734 = vmul.f32 %v727, %v732
    %736 = vrot.lane.b32.xlu0 %v734, 20
    %v737 = vpop.permute.xlu0 %736
    %v739 = vadd.f32 %v729, %v737
    %v740 = vtanh.pop %v739
    %742 = vrot.lane.b32.xlu0 %v740, 20
    %v743 = vpop.permute.xlu0 %742
    %v745 = vmul.f32 %v727, %v743
    %v746 = vrot.slane %v637, 4
    %747 = vrot.lane.b32.xlu0 %v746, 88
    %v748 = vpop.permute.xlu0 %747
    %v749 = vsel %vm115, %v748, 0
    %751 = vmatprep.subr.mxu0 0.0
    %752 = vmatpush1.msra.mxu0 %v14
    %753 = vmatprep.subr.mxu0 0.0
    %754 = vmatpush1.msra.mxu0 %v15
    %755 = vmatprep.subr.mxu0 0.0
    %756 = vmatpush1.msra.mxu0 %v121
    %757 = vmatprep.subr.mxu0 0.0
    %758 = vmatpush1.msra.mxu0 0.0
    %759 = vmatprep.subr.mxu0 0.0
    %760 = vmatpush1.msra.mxu0 0.0
    %761 = vmatprep.subr.mxu0 0.0
    %762 = vmatpush1.msra.mxu0 0.0
    %763 = vmatprep.subr.mxu0 0.0
    %764 = vmatpush1.msra.mxu0 0.0
    %765 = vmatprep.subr.mxu0 0.0
    %766 = vmatpush1.msra.mxu0 0.0
    %767 = vmatprep.subr.mxu0 0.0
    %768 = vmatpush1.msra.mxu0 0.0
    %769 = vmatprep.subr.mxu0 0.0
    %770 = vmatpush1.msra.mxu0 0.0
    %771 = vmatprep.subr.mxu0 0.0
    %772 = vmatpush1.msra.mxu0 0.0
    %773 = vmatprep.subr.mxu0 0.0
    %774 = vmatpush1.msra.mxu0 0.0
    %775 = vmatprep.subr.mxu0 0.0
    %776 = vmatpush1.msra.mxu0 0.0
    %777 = vmatprep.subr.mxu0 0.0
    %778 = vmatpush1.msra.mxu0 0.0
    %779 = vmatprep.subr.mxu0 0.0
    %780 = vmatpush1.msra.mxu0 0.0
    %781 = vmatprep.subr.mxu0 0.0
    %782 = vmatpush1.msra.mxu0 0.0
    %783 = vmatprep.subr.mxu0 0.0
    %784 = vmatpush1.msra.mxu0 0.0
    %785 = vmatprep.subr.mxu0 0.0
    %786 = vmatpush1.msra.mxu0 0.0
    %787 = vmatprep.subr.mxu0 0.0
    %788 = vmatpush1.msra.mxu0 0.0
    %789 = vmatprep.subr.mxu0 0.0
    %790 = vmatpush1.msra.mxu0 0.0
    %791 = vmatprep.subr.mxu0 0.0
    %792 = vmatpush1.msra.mxu0 0.0
    %793 = vmatprep.subr.mxu0 0.0
    %794 = vmatpush1.msra.mxu0 0.0
    %795 = vmatprep.subr.mxu0 0.0
    %796 = vmatpush1.msra.mxu0 0.0
    %797 = vmatprep.subr.mxu0 0.0
    %798 = vmatpush1.msra.mxu0 0.0
    %799 = vmatprep.subr.mxu0 0.0
    %800 = vmatpush1.msra.mxu0 0.0
    %801 = vmatprep.subr.mxu0 0.0
    %802 = vmatpush1.msra.mxu0 0.0
    %803 = vmatprep.subr.mxu0 0.0
    %804 = vmatpush1.msra.mxu0 0.0
    %805 = vmatprep.subr.mxu0 0.0
    %806 = vmatpush1.msra.mxu0 0.0
    %807 = vmatprep.subr.mxu0 0.0
    %808 = vmatpush1.msra.mxu0 0.0
    %809 = vmatprep.subr.mxu0 0.0
    %810 = vmatpush1.msra.mxu0 0.0
    %811 = vmatprep.subr.mxu0 0.0
    %812 = vmatpush1.msra.mxu0 0.0
    %813 = vmatprep.subr.mxu0 0.0
    %814 = vmatpush1.msra.mxu0 0.0
    %815 = vmatprep.mubr.f32.mxu0 0.0
    %816 = vmatmul.mubr.f32.gmra.mrb[0].mxu0 %v749
    %v817 = vpop.f32.mrb[0].mxu0
    %v818 = vadd.f32 0.0, %v817
    %v819 = vpop.f32.mrb[0].mxu0
    %820 = vdwg.mxu0
    %v822 = vrot.slane %v818, 2
    %v824 = vadd.f32 %v107, %v822
    %v825 = vxor.u32 %v824, 2147483648
    %v826 = vmul.f32 %v825, 1.442695
    %v827 = vpow.pop %v826
    %v828 = vadd.f32 %v827, 1.0
    %v829 = vrcp.pop %v828
    %v830 = vmul.f32 1.0, %v829
    %v831 = vtanh.pop %v824
    %v833 = vrot.slane %v631, 6
    %v835 = vmul.f32 %v830, %v833
    %837 = vrot.lane.b32.xlu0 %v831, 68
    %v838 = vpop.permute.xlu0 %837
    %v840 = vmul.f32 %v830, %v838
    %842 = vrot.lane.b32.xlu0 %v840, 20
    %v843 = vpop.permute.xlu0 %842
    %v845 = vadd.f32 %v835, %v843
    %v846 = vtanh.pop %v845
    %848 = vrot.lane.b32.xlu0 %v846, 20
    %v849 = vpop.permute.xlu0 %848
    %v851 = vmul.f32 %v830, %v849
    %853 = vrot.lane.b32.xlu0 %v851, 88
    %v854 = vpop.permute.xlu0 %853
    %v857 = vrot.slane %v745, 2
    %858 = vrot.lane.b32.xlu0 %v857, 108
    %v859 = vpop.permute.xlu0 %858
    %v861 = vsel %vm115, %v854, %v859
    %v863 = vrot.slane %v861, 6
    %v864 = vsel %vm223, %v863, 0
    %866 = vmatprep.subr.mxu0 0.0
    %867 = vmatpush1.msra.mxu0 %v17
    %868 = vmatprep.subr.mxu0 0.0
    %869 = vmatpush1.msra.mxu0 %v18
    %870 = vmatprep.subr.mxu0 0.0
    %871 = vmatpush1.msra.mxu0 %v19
    %872 = vmatprep.subr.mxu0 0.0
    %873 = vmatpush1.msra.mxu0 %v20
    %874 = vmatprep.subr.mxu0 0.0
    %875 = vmatpush1.msra.mxu0 %v21
    %876 = vmatprep.subr.mxu0 0.0
    %877 = vmatpush1.msra.mxu0 0.0
    %878 = vmatprep.subr.mxu0 0.0
    %879 = vmatpush1.msra.mxu0 0.0
    %880 = vmatprep.subr.mxu0 0.0
    %881 = vmatpush1.msra.mxu0 0.0
    %882 = vmatprep.subr.mxu0 0.0
    %883 = vmatpush1.msra.mxu0 0.0
    %884 = vmatprep.subr.mxu0 0.0
    %885 = vmatpush1.msra.mxu0 0.0
    %886 = vmatprep.subr.mxu0 0.0
    %887 = vmatpush1.msra.mxu0 0.0
    %888 = vmatprep.subr.mxu0 0.0
    %889 = vmatpush1.msra.mxu0 0.0
    %890 = vmatprep.subr.mxu0 0.0
    %891 = vmatpush1.msra.mxu0 0.0
    %892 = vmatprep.subr.mxu0 0.0
    %893 = vmatpush1.msra.mxu0 0.0
    %894 = vmatprep.subr.mxu0 0.0
    %895 = vmatpush1.msra.mxu0 0.0
    %896 = vmatprep.subr.mxu0 0.0
    %897 = vmatpush1.msra.mxu0 0.0
    %898 = vmatprep.subr.mxu0 0.0
    %899 = vmatpush1.msra.mxu0 0.0
    %900 = vmatprep.subr.mxu0 0.0
    %901 = vmatpush1.msra.mxu0 0.0
    %902 = vmatprep.subr.mxu0 0.0
    %903 = vmatpush1.msra.mxu0 0.0
    %904 = vmatprep.subr.mxu0 0.0
    %905 = vmatpush1.msra.mxu0 0.0
    %906 = vmatprep.subr.mxu0 0.0
    %907 = vmatpush1.msra.mxu0 0.0
    %908 = vmatprep.subr.mxu0 0.0
    %909 = vmatpush1.msra.mxu0 0.0
    %910 = vmatprep.subr.mxu0 0.0
    %911 = vmatpush1.msra.mxu0 0.0
    %912 = vmatprep.subr.mxu0 0.0
    %913 = vmatpush1.msra.mxu0 0.0
    %914 = vmatprep.subr.mxu0 0.0
    %915 = vmatpush1.msra.mxu0 0.0
    %916 = vmatprep.subr.mxu0 0.0
    %917 = vmatpush1.msra.mxu0 0.0
    %918 = vmatprep.subr.mxu0 0.0
    %919 = vmatpush1.msra.mxu0 0.0
    %920 = vmatprep.subr.mxu0 0.0
    %921 = vmatpush1.msra.mxu0 0.0
    %922 = vmatprep.subr.mxu0 0.0
    %923 = vmatpush1.msra.mxu0 0.0
    %924 = vmatprep.subr.mxu0 0.0
    %925 = vmatpush1.msra.mxu0 0.0
    %926 = vmatprep.subr.mxu0 0.0
    %927 = vmatpush1.msra.mxu0 0.0
    %928 = vmatprep.subr.mxu0 0.0
    %929 = vmatpush1.msra.mxu0 0.0
    %930 = vmatprep.mubr.f32.mxu0 0.0
    %931 = vmatmul.mubr.f32.gmra.mrb[0].mxu0 %v864
    %v932 = vpop.f32.mrb[0].mxu0
    %v933 = vadd.f32 %v26, %v932
    %v934 = vpop.f32.mrb[0].mxu0
    %935 = vdwg.mxu0
    %v936 = vxor.u32 %v933, 2147483648
    %v937 = vmul.f32 %v936, 1.442695
    %v938 = vpow.pop %v937
    %v939 = vadd.f32 %v938, 1.0
    %v940 = vrcp.pop %v939
    %v941 = vmul.f32 1.0, %v940
    %v942 = vtanh.pop %v933
    %v943 = vmul.f32 %v941, %v739
    %945 = vrot.lane.b32.xlu0 %v942, 68
    %v946 = vpop.permute.xlu0 %945
    %v948 = vmul.f32 %v941, %v946
    %950 = vrot.lane.b32.xlu0 %v948, 20
    %v951 = vpop.permute.xlu0 %950
    %v953 = vadd.f32 %v943, %v951
    %v954 = vtanh.pop %v953
    %956 = vrot.lane.b32.xlu0 %v954, 20
    %v957 = vpop.permute.xlu0 %956
    %v959 = vmul.f32 %v941, %v957
    %v960 = vrot.slane %v851, 6
    %961 = vrot.lane.b32.xlu0 %v960, 88
    %v962 = vpop.permute.xlu0 %961
    %v963 = vsel %vm115, %v962, 0
    %965 = vmatprep.subr.mxu0 0.0
    %966 = vmatpush1.msra.mxu0 %v14
    %967 = vmatprep.subr.mxu0 0.0
    %968 = vmatpush1.msra.mxu0 %v15
    %969 = vmatprep.subr.mxu0 0.0
    %970 = vmatpush1.msra.mxu0 %v121
    %971 = vmatprep.subr.mxu0 0.0
    %972 = vmatpush1.msra.mxu0 0.0
    %973 = vmatprep.subr.mxu0 0.0
    %974 = vmatpush1.msra.mxu0 0.0
    %975 = vmatprep.subr.mxu0 0.0
    %976 = vmatpush1.msra.mxu0 0.0
    %977 = vmatprep.subr.mxu0 0.0
    %978 = vmatpush1.msra.mxu0 0.0
    %979 = vmatprep.subr.mxu0 0.0
    %980 = vmatpush1.msra.mxu0 0.0
    %981 = vmatprep.subr.mxu0 0.0
    %982 = vmatpush1.msra.mxu0 0.0
    %983 = vmatprep.subr.mxu0 0.0
    %984 = vmatpush1.msra.mxu0 0.0
    %985 = vmatprep.subr.mxu0 0.0
    %986 = vmatpush1.msra.mxu0 0.0
    %987 = vmatprep.subr.mxu0 0.0
    %988 = vmatpush1.msra.mxu0 0.0
    %989 = vmatprep.subr.mxu0 0.0
    %990 = vmatpush1.msra.mxu0 0.0
    %991 = vmatprep.subr.mxu0 0.0
    %992 = vmatpush1.msra.mxu0 0.0
    %993 = vmatprep.subr.mxu0 0.0
    %994 = vmatpush1.msra.mxu0 0.0
    %995 = vmatprep.subr.mxu0 0.0
    %996 = vmatpush1.msra.mxu0 0.0
    %997 = vmatprep.subr.mxu0 0.0
    %998 = vmatpush1.msra.mxu0 0.0
    %999 = vmatprep.subr.mxu0 0.0
    %1000 = vmatpush1.msra.mxu0 0.0
    %1001 = vmatprep.subr.mxu0 0.0
    %1002 = vmatpush1.msra.mxu0 0.0
    %1003 = vmatprep.subr.mxu0 0.0
    %1004 = vmatpush1.msra.mxu0 0.0
    %1005 = vmatprep.subr.mxu0 0.0
    %1006 = vmatpush1.msra.mxu0 0.0
    %1007 = vmatprep.subr.mxu0 0.0
    %1008 = vmatpush1.msra.mxu0 0.0
    %1009 = vmatprep.subr.mxu0 0.0
    %1010 = vmatpush1.msra.mxu0 0.0
    %1011 = vmatprep.subr.mxu0 0.0
    %1012 = vmatpush1.msra.mxu0 0.0
    %1013 = vmatprep.subr.mxu0 0.0
    %1014 = vmatpush1.msra.mxu0 0.0
    %1015 = vmatprep.subr.mxu0 0.0
    %1016 = vmatpush1.msra.mxu0 0.0
    %1017 = vmatprep.subr.mxu0 0.0
    %1018 = vmatpush1.msra.mxu0 0.0
    %1019 = vmatprep.subr.mxu0 0.0
    %1020 = vmatpush1.msra.mxu0 0.0
    %1021 = vmatprep.subr.mxu0 0.0
    %1022 = vmatpush1.msra.mxu0 0.0
    %1023 = vmatprep.subr.mxu0 0.0
    %1024 = vmatpush1.msra.mxu0 0.0
    %1025 = vmatprep.subr.mxu0 0.0
    %1026 = vmatpush1.msra.mxu0 0.0
    %1027 = vmatprep.subr.mxu0 0.0
    %1028 = vmatpush1.msra.mxu0 0.0
    %1029 = vmatprep.mubr.f32.mxu0 0.0
    %1030 = vmatmul.mubr.f32.gmra.mrb[0].mxu0 %v963
    %v1031 = vpop.f32.mrb[0].mxu0
    %v1032 = vadd.f32 0.0, %v1031
    %v1033 = vpop.f32.mrb[0].mxu0
    %1034 = vdwg.mxu0
    %v1035 = vadd.f32 %v112, %v1032
    %v1036 = vxor.u32 %v1035, 2147483648
    %v1037 = vmul.f32 %v1036, 1.442695
    %v1038 = vpow.pop %v1037
    %v1039 = vadd.f32 %v1038, 1.0
    %v1040 = vrcp.pop %v1039
    %v1041 = vmul.f32 1.0, %v1040
    %v1042 = vtanh.pop %v1035
    %v1044 = vrot.slane %v845, 6
    %v1046 = vmul.f32 %v1041, %v1044
    %1048 = vrot.lane.b32.xlu0 %v1042, 68
    %v1049 = vpop.permute.xlu0 %1048
    %v1051 = vmul.f32 %v1041, %v1049
    %1053 = vrot.lane.b32.xlu0 %v1051, 20
    %v1054 = vpop.permute.xlu0 %1053
    %v1056 = vadd.f32 %v1046, %v1054
    %v1057 = vtanh.pop %v1056
    %1059 = vrot.lane.b32.xlu0 %v1057, 20
    %v1060 = vpop.permute.xlu0 %1059
    %v1062 = vmul.f32 %v1041, %v1060
    %1064 = vrot.lane.b32.xlu0 %v1062, 88
    %v1065 = vpop.permute.xlu0 %1064
    %1068 = vrot.lane.b32.xlu0 %v959, 108
    %v1069 = vpop.permute.xlu0 %1068
    %v1071 = vsel %vm115, %v1065, %v1069
    %v1073 = vsel %vm223, %v1071, 0
    %1075 = vmatprep.subr.mxu0 0.0
    %1076 = vmatpush1.msra.mxu0 %v17
    %1077 = vmatprep.subr.mxu0 0.0
    %1078 = vmatpush1.msra.mxu0 %v18
    %1079 = vmatprep.subr.mxu0 0.0
    %1080 = vmatpush1.msra.mxu0 %v19
    %1081 = vmatprep.subr.mxu0 0.0
    %1082 = vmatpush1.msra.mxu0 %v20
    %1083 = vmatprep.subr.mxu0 0.0
    %1084 = vmatpush1.msra.mxu0 %v21
    %1085 = vmatprep.subr.mxu0 0.0
    %1086 = vmatpush1.msra.mxu0 0.0
    %1087 = vmatprep.subr.mxu0 0.0
    %1088 = vmatpush1.msra.mxu0 0.0
    %1089 = vmatprep.subr.mxu0 0.0
    %1090 = vmatpush1.msra.mxu0 0.0
    %1091 = vmatprep.subr.mxu0 0.0
    %1092 = vmatpush1.msra.mxu0 0.0
    %1093 = vmatprep.subr.mxu0 0.0
    %1094 = vmatpush1.msra.mxu0 0.0
    %1095 = vmatprep.subr.mxu0 0.0
    %1096 = vmatpush1.msra.mxu0 0.0
    %1097 = vmatprep.subr.mxu0 0.0
    %1098 = vmatpush1.msra.mxu0 0.0
    %1099 = vmatprep.subr.mxu0 0.0
    %1100 = vmatpush1.msra.mxu0 0.0
    %1101 = vmatprep.subr.mxu0 0.0
    %1102 = vmatpush1.msra.mxu0 0.0
    %1103 = vmatprep.subr.mxu0 0.0
    %1104 = vmatpush1.msra.mxu0 0.0
    %1105 = vmatprep.subr.mxu0 0.0
    %1106 = vmatpush1.msra.mxu0 0.0
    %1107 = vmatprep.subr.mxu0 0.0
    %1108 = vmatpush1.msra.mxu0 0.0
    %1109 = vmatprep.subr.mxu0 0.0
    %1110 = vmatpush1.msra.mxu0 0.0
    %1111 = vmatprep.subr.mxu0 0.0
    %1112 = vmatpush1.msra.mxu0 0.0
    %1113 = vmatprep.subr.mxu0 0.0
    %1114 = vmatpush1.msra.mxu0 0.0
    %1115 = vmatprep.subr.mxu0 0.0
    %1116 = vmatpush1.msra.mxu0 0.0
    %1117 = vmatprep.subr.mxu0 0.0
    %1118 = vmatpush1.msra.mxu0 0.0
    %1119 = vmatprep.subr.mxu0 0.0
    %1120 = vmatpush1.msra.mxu0 0.0
    %1121 = vmatprep.subr.mxu0 0.0
    %1122 = vmatpush1.msra.mxu0 0.0
    %1123 = vmatprep.subr.mxu0 0.0
    %1124 = vmatpush1.msra.mxu0 0.0
    %1125 = vmatprep.subr.mxu0 0.0
    %1126 = vmatpush1.msra.mxu0 0.0
    %1127 = vmatprep.subr.mxu0 0.0
    %1128 = vmatpush1.msra.mxu0 0.0
    %1129 = vmatprep.subr.mxu0 0.0
    %1130 = vmatpush1.msra.mxu0 0.0
    %1131 = vmatprep.subr.mxu0 0.0
    %1132 = vmatpush1.msra.mxu0 0.0
    %1133 = vmatprep.subr.mxu0 0.0
    %1134 = vmatpush1.msra.mxu0 0.0
    %1135 = vmatprep.subr.mxu0 0.0
    %1136 = vmatpush1.msra.mxu0 0.0
    %1137 = vmatprep.subr.mxu0 0.0
    %1138 = vmatpush1.msra.mxu0 0.0
    %1139 = vmatprep.mubr.f32.mxu0 0.0
    %1140 = vmatmul.mubr.f32.gmra.mrb[0].mxu0 %v1073
    %v1141 = vpop.f32.mrb[0].mxu0
    %v1142 = vadd.f32 %v26, %v1141
    %v1143 = vpop.f32.mrb[0].mxu0
    %1144 = vdwg.mxu0
    %v1145 = vxor.u32 %v1142, 2147483648
    %v1146 = vmul.f32 %v1145, 1.442695
    %v1147 = vpow.pop %v1146
    %v1148 = vadd.f32 %v1147, 1.0
    %v1149 = vrcp.pop %v1148
    %v1150 = vmul.f32 1.0, %v1149
    %v1151 = vtanh.pop %v1142
    %v1152 = vmul.f32 %v1150, %v953
    %1154 = vrot.lane.b32.xlu0 %v1151, 68
    %v1155 = vpop.permute.xlu0 %1154
    %v1157 = vmul.f32 %v1150, %v1155
    %1159 = vrot.lane.b32.xlu0 %v1157, 20
    %v1160 = vpop.permute.xlu0 %1159
    %v1162 = vadd.f32 %v1152, %v1160
    %v1163 = vtanh.pop %v1162
    %1165 = vrot.lane.b32.xlu0 %v1163, 20
    %v1166 = vpop.permute.xlu0 %1165
    %v1168 = vmul.f32 %v1150, %v1166
    %v1169 = vsel %vm115, %v1065, 0
    %1171 = vmatprep.subr.mxu0 0.0
    %1172 = vmatpush1.msra.mxu0 %v14
    %1173 = vmatprep.subr.mxu0 0.0
    %1174 = vmatpush1.msra.mxu0 %v15
    %1175 = vmatprep.subr.mxu0 0.0
    %1176 = vmatpush1.msra.mxu0 %v121
    %1177 = vmatprep.subr.mxu0 0.0
    %1178 = vmatpush1.msra.mxu0 0.0
    %1179 = vmatprep.subr.mxu0 0.0
    %1180 = vmatpush1.msra.mxu0 0.0
    %1181 = vmatprep.subr.mxu0 0.0
    %1182 = vmatpush1.msra.mxu0 0.0
    %1183 = vmatprep.subr.mxu0 0.0
    %1184 = vmatpush1.msra.mxu0 0.0
    %1185 = vmatprep.subr.mxu0 0.0
    %1186 = vmatpush1.msra.mxu0 0.0
    %1187 = vmatprep.subr.mxu0 0.0
    %1188 = vmatpush1.msra.mxu0 0.0
    %1189 = vmatprep.subr.mxu0 0.0
    %1190 = vmatpush1.msra.mxu0 0.0
    %1191 = vmatprep.subr.mxu0 0.0
    %1192 = vmatpush1.msra.mxu0 0.0
    %1193 = vmatprep.subr.mxu0 0.0
    %1194 = vmatpush1.msra.mxu0 0.0
    %1195 = vmatprep.subr.mxu0 0.0
    %1196 = vmatpush1.msra.mxu0 0.0
    %1197 = vmatprep.subr.mxu0 0.0
    %1198 = vmatpush1.msra.mxu0 0.0
    %1199 = vmatprep.subr.mxu0 0.0
    %1200 = vmatpush1.msra.mxu0 0.0
    %1201 = vmatprep.subr.mxu0 0.0
    %1202 = vmatpush1.msra.mxu0 0.0
    %1203 = vmatprep.subr.mxu0 0.0
    %1204 = vmatpush1.msra.mxu0 0.0
    %1205 = vmatprep.subr.mxu0 0.0
    %1206 = vmatpush1.msra.mxu0 0.0
    %1207 = vmatprep.subr.mxu0 0.0
    %1208 = vmatpush1.msra.mxu0 0.0
    %1209 = vmatprep.subr.mxu0 0.0
    %1210 = vmatpush1.msra.mxu0 0.0
    %1211 = vmatprep.subr.mxu0 0.0
    %1212 = vmatpush1.msra.mxu0 0.0
    %1213 = vmatprep.subr.mxu0 0.0
    %1214 = vmatpush1.msra.mxu0 0.0
    %1215 = vmatprep.subr.mxu0 0.0
    %1216 = vmatpush1.msra.mxu0 0.0
    %1217 = vmatprep.subr.mxu0 0.0
    %1218 = vmatpush1.msra.mxu0 0.0
    %1219 = vmatprep.subr.mxu0 0.0
    %1220 = vmatpush1.msra.mxu0 0.0
    %1221 = vmatprep.subr.mxu0 0.0
    %1222 = vmatpush1.msra.mxu0 0.0
    %1223 = vmatprep.subr.mxu0 0.0
    %1224 = vmatpush1.msra.mxu0 0.0
    %1225 = vmatprep.subr.mxu0 0.0
    %1226 = vmatpush1.msra.mxu0 0.0
    %1227 = vmatprep.subr.mxu0 0.0
    %1228 = vmatpush1.msra.mxu0 0.0
    %1229 = vmatprep.subr.mxu0 0.0
    %1230 = vmatpush1.msra.mxu0 0.0
    %1231 = vmatprep.subr.mxu0 0.0
    %1232 = vmatpush1.msra.mxu0 0.0
    %1233 = vmatprep.subr.mxu0 0.0
    %1234 = vmatpush1.msra.mxu0 0.0
    %1235 = vmatprep.mubr.f32.mxu0 0.0
    %1236 = vmatmul.mubr.f32.gmra.mrb[0].mxu0 %v1169
    %v1237 = vpop.f32.mrb[0].mxu0
    %v1238 = vadd.f32 0.0, %v1237
    %v1239 = vpop.f32.mrb[0].mxu0
    %1240 = vdwg.mxu0
    %v1242 = vrot.slane %v1238, 6
    %v1244 = vadd.f32 %v112, %v1242
    %v1245 = vxor.u32 %v1244, 2147483648
    %v1246 = vmul.f32 %v1245, 1.442695
    %v1247 = vpow.pop %v1246
    %v1248 = vadd.f32 %v1247, 1.0
    %v1249 = vrcp.pop %v1248
    %v1250 = vmul.f32 1.0, %v1249
    %v1251 = vtanh.pop %v1244
    %v1253 = vrot.slane %v1056, 6
    %v1255 = vmul.f32 %v1250, %v1253
    %1257 = vrot.lane.b32.xlu0 %v1251, 68
    %v1258 = vpop.permute.xlu0 %1257
    %v1260 = vmul.f32 %v1250, %v1258
    %1262 = vrot.lane.b32.xlu0 %v1260, 20
    %v1263 = vpop.permute.xlu0 %1262
    %v1265 = vadd.f32 %v1255, %v1263
    %v1266 = vtanh.pop %v1265
    %1268 = vrot.lane.b32.xlu0 %v1266, 20
    %v1269 = vpop.permute.xlu0 %1268
    %v1271 = vmul.f32 %v1250, %v1269
    %1273 = vrot.lane.b32.xlu0 %v1271, 88
    %v1274 = vpop.permute.xlu0 %1273
    %v1277 = vrot.slane %v1168, 6
    %1278 = vrot.lane.b32.xlu0 %v1277, 108
    %v1279 = vpop.permute.xlu0 %1278
    %v1281 = vsel %vm115, %v1274, %v1279
    %v1283 = vrot.slane %v1281, 2
    %v1284 = vsel %vm223, %v1283, 0
    %1286 = vmatprep.subr.mxu0 0.0
    %1287 = vmatpush1.msra.mxu0 %v17
    %1288 = vmatprep.subr.mxu0 0.0
    %1289 = vmatpush1.msra.mxu0 %v18
    %1290 = vmatprep.subr.mxu0 0.0
    %1291 = vmatpush1.msra.mxu0 %v19
    %1292 = vmatprep.subr.mxu0 0.0
    %1293 = vmatpush1.msra.mxu0 %v20
    %1294 = vmatprep.subr.mxu0 0.0
    %1295 = vmatpush1.msra.mxu0 %v21
    %1296 = vmatprep.subr.mxu0 0.0
    %1297 = vmatpush1.msra.mxu0 0.0
    %1298 = vmatprep.subr.mxu0 0.0
    %1299 = vmatpush1.msra.mxu0 0.0
    %1300 = vmatprep.subr.mxu0 0.0
    %1301 = vmatpush1.msra.mxu0 0.0
    %1302 = vmatprep.subr.mxu0 0.0
    %1303 = vmatpush1.msra.mxu0 0.0
    %1304 = vmatprep.subr.mxu0 0.0
    %1305 = vmatpush1.msra.mxu0 0.0
    %1306 = vmatprep.subr.mxu0 0.0
    %1307 = vmatpush1.msra.mxu0 0.0
    %1308 = vmatprep.subr.mxu0 0.0
    %1309 = vmatpush1.msra.mxu0 0.0
    %1310 = vmatprep.subr.mxu0 0.0
    %1311 = vmatpush1.msra.mxu0 0.0
    %1312 = vmatprep.subr.mxu0 0.0
    %1313 = vmatpush1.msra.mxu0 0.0
    %1314 = vmatprep.subr.mxu0 0.0
    %1315 = vmatpush1.msra.mxu0 0.0
    %1316 = vmatprep.subr.mxu0 0.0
    %1317 = vmatpush1.msra.mxu0 0.0
    %1318 = vmatprep.subr.mxu0 0.0
    %1319 = vmatpush1.msra.mxu0 0.0
    %1320 = vmatprep.subr.mxu0 0.0
    %1321 = vmatpush1.msra.mxu0 0.0
    %1322 = vmatprep.subr.mxu0 0.0
    %1323 = vmatpush1.msra.mxu0 0.0
    %1324 = vmatprep.subr.mxu0 0.0
    %1325 = vmatpush1.msra.mxu0 0.0
    %1326 = vmatprep.subr.mxu0 0.0
    %1327 = vmatpush1.msra.mxu0 0.0
    %1328 = vmatprep.subr.mxu0 0.0
    %1329 = vmatpush1.msra.mxu0 0.0
    %1330 = vmatprep.subr.mxu0 0.0
    %1331 = vmatpush1.msra.mxu0 0.0
    %1332 = vmatprep.subr.mxu0 0.0
    %1333 = vmatpush1.msra.mxu0 0.0
    %1334 = vmatprep.subr.mxu0 0.0
    %1335 = vmatpush1.msra.mxu0 0.0
    %1336 = vmatprep.subr.mxu0 0.0
    %1337 = vmatpush1.msra.mxu0 0.0
    %1338 = vmatprep.subr.mxu0 0.0
    %1339 = vmatpush1.msra.mxu0 0.0
    %1340 = vmatprep.subr.mxu0 0.0
    %1341 = vmatpush1.msra.mxu0 0.0
    %1342 = vmatprep.subr.mxu0 0.0
    %1343 = vmatpush1.msra.mxu0 0.0
    %1344 = vmatprep.subr.mxu0 0.0
    %1345 = vmatpush1.msra.mxu0 0.0
    %1346 = vmatprep.subr.mxu0 0.0
    %1347 = vmatpush1.msra.mxu0 0.0
    %1348 = vmatprep.subr.mxu0 0.0
    %1349 = vmatpush1.msra.mxu0 0.0
    %1350 = vmatprep.mubr.f32.mxu0 0.0
    %1351 = vmatmul.mubr.f32.gmra.mrb[0].mxu0 %v1284
    %v1352 = vpop.f32.mrb[0].mxu0
    %v1353 = vadd.f32 %v26, %v1352
    %v1354 = vpop.f32.mrb[0].mxu0
    %1355 = vdwg.mxu0
    %v1356 = vxor.u32 %v1353, 2147483648
    %v1357 = vmul.f32 %v1356, 1.442695
    %v1358 = vpow.pop %v1357
    %v1359 = vadd.f32 %v1358, 1.0
    %v1360 = vrcp.pop %v1359
    %v1361 = vmul.f32 1.0, %v1360
    %v1362 = vtanh.pop %v1353
    %v1363 = vmul.f32 %v1361, %v1162
    %1365 = vrot.lane.b32.xlu0 %v1362, 68
    %v1366 = vpop.permute.xlu0 %1365
    %v1368 = vmul.f32 %v1361, %v1366
    %1370 = vrot.lane.b32.xlu0 %v1368, 20
    %v1371 = vpop.permute.xlu0 %1370
    %v1373 = vadd.f32 %v1363, %v1371
    %v1374 = vtanh.pop %v1373
    %1376 = vrot.lane.b32.xlu0 %v1374, 20
    %v1377 = vpop.permute.xlu0 %1376
    %v1379 = vmul.f32 %v1361, %v1377
    %v1380 = vrot.slane %v1271, 2
    %1381 = vrot.lane.b32.xlu0 %v1380, 88
    %v1382 = vpop.permute.xlu0 %1381
    %v1383 = vsel %vm115, %v1382, 0
    %1385 = vmatprep.subr.mxu0 0.0
    %1386 = vmatpush1.msra.mxu0 %v14
    %1387 = vmatprep.subr.mxu0 0.0
    %1388 = vmatpush1.msra.mxu0 %v15
    %1389 = vmatprep.subr.mxu0 0.0
    %1390 = vmatpush1.msra.mxu0 %v121
    %1391 = vmatprep.subr.mxu0 0.0
    %1392 = vmatpush1.msra.mxu0 0.0
    %1393 = vmatprep.subr.mxu0 0.0
    %1394 = vmatpush1.msra.mxu0 0.0
    %1395 = vmatprep.subr.mxu0 0.0
    %1396 = vmatpush1.msra.mxu0 0.0
    %1397 = vmatprep.subr.mxu0 0.0
    %1398 = vmatpush1.msra.mxu0 0.0
    %1399 = vmatprep.subr.mxu0 0.0
    %1400 = vmatpush1.msra.mxu0 0.0
    %1401 = vmatprep.subr.mxu0 0.0
    %1402 = vmatpush1.msra.mxu0 0.0
    %1403 = vmatprep.subr.mxu0 0.0
    %1404 = vmatpush1.msra.mxu0 0.0
    %1405 = vmatprep.subr.mxu0 0.0
    %1406 = vmatpush1.msra.mxu0 0.0
    %1407 = vmatprep.subr.mxu0 0.0
    %1408 = vmatpush1.msra.mxu0 0.0
    %1409 = vmatprep.subr.mxu0 0.0
    %1410 = vmatpush1.msra.mxu0 0.0
    %1411 = vmatprep.subr.mxu0 0.0
    %1412 = vmatpush1.msra.mxu0 0.0
    %1413 = vmatprep.subr.mxu0 0.0
    %1414 = vmatpush1.msra.mxu0 0.0
    %1415 = vmatprep.subr.mxu0 0.0
    %1416 = vmatpush1.msra.mxu0 0.0
    %1417 = vmatprep.subr.mxu0 0.0
    %1418 = vmatpush1.msra.mxu0 0.0
    %1419 = vmatprep.subr.mxu0 0.0
    %1420 = vmatpush1.msra.mxu0 0.0
    %1421 = vmatprep.subr.mxu0 0.0
    %1422 = vmatpush1.msra.mxu0 0.0
    %1423 = vmatprep.subr.mxu0 0.0
    %1424 = vmatpush1.msra.mxu0 0.0
    %1425 = vmatprep.subr.mxu0 0.0
    %1426 = vmatpush1.msra.mxu0 0.0
    %1427 = vmatprep.subr.mxu0 0.0
    %1428 = vmatpush1.msra.mxu0 0.0
    %1429 = vmatprep.subr.mxu0 0.0
    %1430 = vmatpush1.msra.mxu0 0.0
    %1431 = vmatprep.subr.mxu0 0.0
    %1432 = vmatpush1.msra.mxu0 0.0
    %1433 = vmatprep.subr.mxu0 0.0
    %1434 = vmatpush1.msra.mxu0 0.0
    %1435 = vmatprep.subr.mxu0 0.0
    %1436 = vmatpush1.msra.mxu0 0.0
    %1437 = vmatprep.subr.mxu0 0.0
    %1438 = vmatpush1.msra.mxu0 0.0
    %1439 = vmatprep.subr.mxu0 0.0
    %1440 = vmatpush1.msra.mxu0 0.0
    %1441 = vmatprep.subr.mxu0 0.0
    %1442 = vmatpush1.msra.mxu0 0.0
    %1443 = vmatprep.subr.mxu0 0.0
    %1444 = vmatpush1.msra.mxu0 0.0
    %1445 = vmatprep.subr.mxu0 0.0
    %1446 = vmatpush1.msra.mxu0 0.0
    %1447 = vmatprep.subr.mxu0 0.0
    %1448 = vmatpush1.msra.mxu0 0.0
    %1449 = vmatprep.mubr.f32.mxu0 0.0
    %1450 = vmatmul.mubr.f32.gmra.mrb[0].mxu0 %v1383
    %v1451 = vpop.f32.mrb[0].mxu0
    %v1452 = vadd.f32 0.0, %v1451
    %v1453 = vpop.f32.mrb[0].mxu0
    %1454 = vdwg.mxu0
    %v1456 = vrot.slane %v1452, 4
    %v1458 = vadd.f32 %v112, %v1456
    %v1459 = vxor.u32 %v1458, 2147483648
    %v1460 = vmul.f32 %v1459, 1.442695
    %v1461 = vpow.pop %v1460
    %v1462 = vadd.f32 %v1461, 1.0
    %v1463 = vrcp.pop %v1462
    %v1464 = vmul.f32 1.0, %v1463
    %v1465 = vtanh.pop %v1458
    %v1467 = vrot.slane %v1265, 6
    %v1469 = vmul.f32 %v1464, %v1467
    %1471 = vrot.lane.b32.xlu0 %v1465, 68
    %v1472 = vpop.permute.xlu0 %1471
    %v1474 = vmul.f32 %v1464, %v1472
    %1476 = vrot.lane.b32.xlu0 %v1474, 20
    %v1477 = vpop.permute.xlu0 %1476
    %v1479 = vadd.f32 %v1469, %v1477
    %v1480 = vtanh.pop %v1479
    %1482 = vrot.lane.b32.xlu0 %v1480, 20
    %v1483 = vpop.permute.xlu0 %1482
    %v1485 = vmul.f32 %v1464, %v1483
    %1487 = vrot.lane.b32.xlu0 %v1485, 88
    %v1488 = vpop.permute.xlu0 %1487
    %v1491 = vrot.slane %v1379, 4
    %1492 = vrot.lane.b32.xlu0 %v1491, 108
    %v1493 = vpop.permute.xlu0 %1492
    %v1495 = vsel %vm115, %v1488, %v1493
    %v1497 = vrot.slane %v1495, 4
    %v1498 = vsel %vm223, %v1497, 0
    %1500 = vmatprep.subr.mxu0 0.0
    %1501 = vmatpush1.msra.mxu0 %v17
    %1502 = vmatprep.subr.mxu0 0.0
    %1503 = vmatpush1.msra.mxu0 %v18
    %1504 = vmatprep.subr.mxu0 0.0
    %1505 = vmatpush1.msra.mxu0 %v19
    %1506 = vmatprep.subr.mxu0 0.0
    %1507 = vmatpush1.msra.mxu0 %v20
    %1508 = vmatprep.subr.mxu0 0.0
    %1509 = vmatpush1.msra.mxu0 %v21
    %1510 = vmatprep.subr.mxu0 0.0
    %1511 = vmatpush1.msra.mxu0 0.0
    %1512 = vmatprep.subr.mxu0 0.0
    %1513 = vmatpush1.msra.mxu0 0.0
    %1514 = vmatprep.subr.mxu0 0.0
    %1515 = vmatpush1.msra.mxu0 0.0
    %1516 = vmatprep.subr.mxu0 0.0
    %1517 = vmatpush1.msra.mxu0 0.0
    %1518 = vmatprep.subr.mxu0 0.0
    %1519 = vmatpush1.msra.mxu0 0.0
    %1520 = vmatprep.subr.mxu0 0.0
    %1521 = vmatpush1.msra.mxu0 0.0
    %1522 = vmatprep.subr.mxu0 0.0
    %1523 = vmatpush1.msra.mxu0 0.0
    %1524 = vmatprep.subr.mxu0 0.0
    %1525 = vmatpush1.msra.mxu0 0.0
    %1526 = vmatprep.subr.mxu0 0.0
    %1527 = vmatpush1.msra.mxu0 0.0
    %1528 = vmatprep.subr.mxu0 0.0
    %1529 = vmatpush1.msra.mxu0 0.0
    %1530 = vmatprep.subr.mxu0 0.0
    %1531 = vmatpush1.msra.mxu0 0.0
    %1532 = vmatprep.subr.mxu0 0.0
    %1533 = vmatpush1.msra.mxu0 0.0
    %1534 = vmatprep.subr.mxu0 0.0
    %1535 = vmatpush1.msra.mxu0 0.0
    %1536 = vmatprep.subr.mxu0 0.0
    %1537 = vmatpush1.msra.mxu0 0.0
    %1538 = vmatprep.subr.mxu0 0.0
    %1539 = vmatpush1.msra.mxu0 0.0
    %1540 = vmatprep.subr.mxu0 0.0
    %1541 = vmatpush1.msra.mxu0 0.0
    %1542 = vmatprep.subr.mxu0 0.0
    %1543 = vmatpush1.msra.mxu0 0.0
    %1544 = vmatprep.subr.mxu0 0.0
    %1545 = vmatpush1.msra.mxu0 0.0
    %1546 = vmatprep.subr.mxu0 0.0
    %1547 = vmatpush1.msra.mxu0 0.0
    %1548 = vmatprep.subr.mxu0 0.0
    %1549 = vmatpush1.msra.mxu0 0.0
    %1550 = vmatprep.subr.mxu0 0.0
    %1551 = vmatpush1.msra.mxu0 0.0
    %1552 = vmatprep.subr.mxu0 0.0
    %1553 = vmatpush1.msra.mxu0 0.0
    %1554 = vmatprep.subr.mxu0 0.0
    %1555 = vmatpush1.msra.mxu0 0.0
    %1556 = vmatprep.subr.mxu0 0.0
    %1557 = vmatpush1.msra.mxu0 0.0
    %1558 = vmatprep.subr.mxu0 0.0
    %1559 = vmatpush1.msra.mxu0 0.0
    %1560 = vmatprep.subr.mxu0 0.0
    %1561 = vmatpush1.msra.mxu0 0.0
    %1562 = vmatprep.subr.mxu0 0.0
    %1563 = vmatpush1.msra.mxu0 0.0
    %1564 = vmatprep.mubr.f32.mxu0 0.0
    %1565 = vmatmul.mubr.f32.gmra.mrb[0].mxu0 %v1498
    %v1566 = vpop.f32.mrb[0].mxu0
    %v1567 = vadd.f32 %v26, %v1566
    %v1568 = vpop.f32.mrb[0].mxu0
    %1569 = vdwg.mxu0
    %v1570 = vxor.u32 %v1567, 2147483648
    %v1571 = vmul.f32 %v1570, 1.442695
    %v1572 = vpow.pop %v1571
    %v1573 = vadd.f32 %v1572, 1.0
    %v1574 = vrcp.pop %v1573
    %v1575 = vmul.f32 1.0, %v1574
    %v1576 = vtanh.pop %v1567
    %v1577 = vmul.f32 %v1575, %v1373
    %1579 = vrot.lane.b32.xlu0 %v1576, 68
    %v1580 = vpop.permute.xlu0 %1579
    %v1582 = vmul.f32 %v1575, %v1580
    %1584 = vrot.lane.b32.xlu0 %v1582, 20
    %v1585 = vpop.permute.xlu0 %1584
    %v1587 = vadd.f32 %v1577, %v1585
    %v1588 = vtanh.pop %v1587
    %1590 = vrot.lane.b32.xlu0 %v1588, 20
    %v1591 = vpop.permute.xlu0 %1590
    %v1593 = vmul.f32 %v1575, %v1591
    %v1594 = vrot.slane %v1485, 4
    %1595 = vrot.lane.b32.xlu0 %v1594, 88
    %v1596 = vpop.permute.xlu0 %1595
    %v1597 = vsel %vm115, %v1596, 0
    %1599 = vmatprep.subr.mxu0 0.0
    %1600 = vmatpush1.msra.mxu0 %v14
    %1601 = vmatprep.subr.mxu0 0.0
    %1602 = vmatpush1.msra.mxu0 %v15
    %1603 = vmatprep.subr.mxu0 0.0
    %1604 = vmatpush1.msra.mxu0 %v121
    %1605 = vmatprep.subr.mxu0 0.0
    %1606 = vmatpush1.msra.mxu0 0.0
    %1607 = vmatprep.subr.mxu0 0.0
    %1608 = vmatpush1.msra.mxu0 0.0
    %1609 = vmatprep.subr.mxu0 0.0
    %1610 = vmatpush1.msra.mxu0 0.0
    %1611 = vmatprep.subr.mxu0 0.0
    %1612 = vmatpush1.msra.mxu0 0.0
    %1613 = vmatprep.subr.mxu0 0.0
    %1614 = vmatpush1.msra.mxu0 0.0
    %1615 = vmatprep.subr.mxu0 0.0
    %1616 = vmatpush1.msra.mxu0 0.0
    %1617 = vmatprep.subr.mxu0 0.0
    %1618 = vmatpush1.msra.mxu0 0.0
    %1619 = vmatprep.subr.mxu0 0.0
    %1620 = vmatpush1.msra.mxu0 0.0
    %1621 = vmatprep.subr.mxu0 0.0
    %1622 = vmatpush1.msra.mxu0 0.0
    %1623 = vmatprep.subr.mxu0 0.0
    %1624 = vmatpush1.msra.mxu0 0.0
    %1625 = vmatprep.subr.mxu0 0.0
    %1626 = vmatpush1.msra.mxu0 0.0
    %1627 = vmatprep.subr.mxu0 0.0
    %1628 = vmatpush1.msra.mxu0 0.0
    %1629 = vmatprep.subr.mxu0 0.0
    %1630 = vmatpush1.msra.mxu0 0.0
    %1631 = vmatprep.subr.mxu0 0.0
    %1632 = vmatpush1.msra.mxu0 0.0
    %1633 = vmatprep.subr.mxu0 0.0
    %1634 = vmatpush1.msra.mxu0 0.0
    %1635 = vmatprep.subr.mxu0 0.0
    %1636 = vmatpush1.msra.mxu0 0.0
    %1637 = vmatprep.subr.mxu0 0.0
    %1638 = vmatpush1.msra.mxu0 0.0
    %1639 = vmatprep.subr.mxu0 0.0
    %1640 = vmatpush1.msra.mxu0 0.0
    %1641 = vmatprep.subr.mxu0 0.0
    %1642 = vmatpush1.msra.mxu0 0.0
    %1643 = vmatprep.subr.mxu0 0.0
    %1644 = vmatpush1.msra.mxu0 0.0
    %1645 = vmatprep.subr.mxu0 0.0
    %1646 = vmatpush1.msra.mxu0 0.0
    %1647 = vmatprep.subr.mxu0 0.0
    %1648 = vmatpush1.msra.mxu0 0.0
    %1649 = vmatprep.subr.mxu0 0.0
    %1650 = vmatpush1.msra.mxu0 0.0
    %1651 = vmatprep.subr.mxu0 0.0
    %1652 = vmatpush1.msra.mxu0 0.0
    %1653 = vmatprep.subr.mxu0 0.0
    %1654 = vmatpush1.msra.mxu0 0.0
    %1655 = vmatprep.subr.mxu0 0.0
    %1656 = vmatpush1.msra.mxu0 0.0
    %1657 = vmatprep.subr.mxu0 0.0
    %1658 = vmatpush1.msra.mxu0 0.0
    %1659 = vmatprep.subr.mxu0 0.0
    %1660 = vmatpush1.msra.mxu0 0.0
    %1661 = vmatprep.subr.mxu0 0.0
    %1662 = vmatpush1.msra.mxu0 0.0
    %1663 = vmatprep.mubr.f32.mxu0 0.0
    %1664 = vmatmul.mubr.f32.gmra.mrb[0].mxu0 %v1597
    %v1665 = vpop.f32.mrb[0].mxu0
    %v1666 = vadd.f32 0.0, %v1665
    %v1667 = vpop.f32.mrb[0].mxu0
    %1668 = vdwg.mxu0
    %v1670 = vrot.slane %v1666, 2
    %v1672 = vadd.f32 %v112, %v1670
    %v1673 = vxor.u32 %v1672, 2147483648
    %v1674 = vmul.f32 %v1673, 1.442695
    %v1675 = vpow.pop %v1674
    %v1676 = vadd.f32 %v1675, 1.0
    %v1677 = vrcp.pop %v1676
    %v1678 = vmul.f32 1.0, %v1677
    %v1679 = vtanh.pop %v1672
    %v1681 = vrot.slane %v1479, 6
    %v1683 = vmul.f32 %v1678, %v1681
    %1685 = vrot.lane.b32.xlu0 %v1679, 68
    %v1686 = vpop.permute.xlu0 %1685
    %v1688 = vmul.f32 %v1678, %v1686
    %1690 = vrot.lane.b32.xlu0 %v1688, 20
    %v1691 = vpop.permute.xlu0 %1690
    %v1693 = vadd.f32 %v1683, %v1691
    %v1694 = vtanh.pop %v1693
    %1696 = vrot.lane.b32.xlu0 %v1694, 20
    %v1697 = vpop.permute.xlu0 %1696
    %v1699 = vmul.f32 %v1678, %v1697
    %1701 = vrot.lane.b32.xlu0 %v1699, 88
    %v1702 = vpop.permute.xlu0 %1701
    %v1705 = vrot.slane %v1593, 2
    %1706 = vrot.lane.b32.xlu0 %v1705, 108
    %v1707 = vpop.permute.xlu0 %1706
    %v1709 = vsel %vm115, %v1702, %v1707
    %v1711 = vrot.slane %v1709, 6
    %v1712 = vsel %vm223, %v1711, 0
    %1714 = vmatprep.subr.mxu0 0.0
    %1715 = vmatpush1.msra.mxu0 %v17
    %1716 = vmatprep.subr.mxu0 0.0
    %1717 = vmatpush1.msra.mxu0 %v18
    %1718 = vmatprep.subr.mxu0 0.0
    %1719 = vmatpush1.msra.mxu0 %v19
    %1720 = vmatprep.subr.mxu0 0.0
    %1721 = vmatpush1.msra.mxu0 %v20
    %1722 = vmatprep.subr.mxu0 0.0
    %1723 = vmatpush1.msra.mxu0 %v21
    %1724 = vmatprep.subr.mxu0 0.0
    %1725 = vmatpush1.msra.mxu0 0.0
    %1726 = vmatprep.subr.mxu0 0.0
    %1727 = vmatpush1.msra.mxu0 0.0
    %1728 = vmatprep.subr.mxu0 0.0
    %1729 = vmatpush1.msra.mxu0 0.0
    %1730 = vmatprep.subr.mxu0 0.0
    %1731 = vmatpush1.msra.mxu0 0.0
    %1732 = vmatprep.subr.mxu0 0.0
    %1733 = vmatpush1.msra.mxu0 0.0
    %1734 = vmatprep.subr.mxu0 0.0
    %1735 = vmatpush1.msra.mxu0 0.0
    %1736 = vmatprep.subr.mxu0 0.0
    %1737 = vmatpush1.msra.mxu0 0.0
    %1738 = vmatprep.subr.mxu0 0.0
    %1739 = vmatpush1.msra.mxu0 0.0
    %1740 = vmatprep.subr.mxu0 0.0
    %1741 = vmatpush1.msra.mxu0 0.0
    %1742 = vmatprep.subr.mxu0 0.0
    %1743 = vmatpush1.msra.mxu0 0.0
    %1744 = vmatprep.subr.mxu0 0.0
    %1745 = vmatpush1.msra.mxu0 0.0
    %1746 = vmatprep.subr.mxu0 0.0
    %1747 = vmatpush1.msra.mxu0 0.0
    %1748 = vmatprep.subr.mxu0 0.0
    %1749 = vmatpush1.msra.mxu0 0.0
    %1750 = vmatprep.subr.mxu0 0.0
    %1751 = vmatpush1.msra.mxu0 0.0
    %1752 = vmatprep.subr.mxu0 0.0
    %1753 = vmatpush1.msra.mxu0 0.0
    %1754 = vmatprep.subr.mxu0 0.0
    %1755 = vmatpush1.msra.mxu0 0.0
    %1756 = vmatprep.subr.mxu0 0.0
    %1757 = vmatpush1.msra.mxu0 0.0
    %1758 = vmatprep.subr.mxu0 0.0
    %1759 = vmatpush1.msra.mxu0 0.0
    %1760 = vmatprep.subr.mxu0 0.0
    %1761 = vmatpush1.msra.mxu0 0.0
    %1762 = vmatprep.subr.mxu0 0.0
    %1763 = vmatpush1.msra.mxu0 0.0
    %1764 = vmatprep.subr.mxu0 0.0
    %1765 = vmatpush1.msra.mxu0 0.0
    %1766 = vmatprep.subr.mxu0 0.0
    %1767 = vmatpush1.msra.mxu0 0.0
    %1768 = vmatprep.subr.mxu0 0.0
    %1769 = vmatpush1.msra.mxu0 0.0
    %1770 = vmatprep.subr.mxu0 0.0
    %1771 = vmatpush1.msra.mxu0 0.0
    %1772 = vmatprep.subr.mxu0 0.0
    %1773 = vmatpush1.msra.mxu0 0.0
    %1774 = vmatprep.subr.mxu0 0.0
    %1775 = vmatpush1.msra.mxu0 0.0
    %1776 = vmatprep.subr.mxu0 0.0
    %1777 = vmatpush1.msra.mxu0 0.0
    %1778 = vmatprep.mubr.f32.mxu0 0.0
    %1779 = vmatmul.mubr.f32.gmra.mrb[0].mxu0 %v1712
    %v1780 = vpop.f32.mrb[0].mxu0
    %v1781 = vadd.f32 %v26, %v1780
    %v1782 = vpop.f32.mrb[0].mxu0
    %1783 = vdwg.mxu0
    %v1784 = vxor.u32 %v1781, 2147483648
    %v1785 = vmul.f32 %v1784, 1.442695
    %v1786 = vpow.pop %v1785
    %v1787 = vadd.f32 %v1786, 1.0
    %v1788 = vrcp.pop %v1787
    %v1789 = vmul.f32 1.0, %v1788
    %v1790 = vtanh.pop %v1781
    %v1791 = vmul.f32 %v1789, %v1587
    %1793 = vrot.lane.b32.xlu0 %v1790, 68
    %v1794 = vpop.permute.xlu0 %1793
    %v1796 = vmul.f32 %v1789, %v1794
    %1798 = vrot.lane.b32.xlu0 %v1796, 20
    %v1799 = vpop.permute.xlu0 %1798
    %v1801 = vadd.f32 %v1791, %v1799
    %v1802 = vtanh.pop %v1801
    %1804 = vrot.lane.b32.xlu0 %v1802, 20
    %v1805 = vpop.permute.xlu0 %1804
    %v1807 = vmul.f32 %v1789, %v1805
    %v1808 = vlaneseq
    %v1809 = vshrl.u32 %v1808, 7
    %v1810 = vsub.s32 0, %v1809
    %v1811 = vrot.slane %v30, %v1810
    %1813 = vrot.lane.b32.xlu0 %v1807, 88
    %v1814 = vpop.permute.xlu0 %1813
    %v1815 = vsel %vm115, %v1814, 0
    %v1818 = vsel %vm119, %v29, 0
    %1820 = vmatprep.subr.mxu0 0.0
    %1821 = vmatpush1.msra.mxu0 %v27
    %1822 = vmatprep.subr.mxu0 0.0
    %1823 = vmatpush1.msra.mxu0 %v28
    %1824 = vmatprep.subr.mxu0 0.0
    %1825 = vmatpush1.msra.mxu0 %v1818
    %1826 = vmatprep.subr.mxu0 0.0
    %1827 = vmatpush1.msra.mxu0 0.0
    %1828 = vmatprep.subr.mxu0 0.0
    %1829 = vmatpush1.msra.mxu0 0.0
    %1830 = vmatprep.subr.mxu0 0.0
    %1831 = vmatpush1.msra.mxu0 0.0
    %1832 = vmatprep.subr.mxu0 0.0
    %1833 = vmatpush1.msra.mxu0 0.0
    %1834 = vmatprep.subr.mxu0 0.0
    %1835 = vmatpush1.msra.mxu0 0.0
    %1836 = vmatprep.subr.mxu0 0.0
    %1837 = vmatpush1.msra.mxu0 0.0
    %1838 = vmatprep.subr.mxu0 0.0
    %1839 = vmatpush1.msra.mxu0 0.0
    %1840 = vmatprep.subr.mxu0 0.0
    %1841 = vmatpush1.msra.mxu0 0.0
    %1842 = vmatprep.subr.mxu0 0.0
    %1843 = vmatpush1.msra.mxu0 0.0
    %1844 = vmatprep.subr.mxu0 0.0
    %1845 = vmatpush1.msra.mxu0 0.0
    %1846 = vmatprep.subr.mxu0 0.0
    %1847 = vmatpush1.msra.mxu0 0.0
    %1848 = vmatprep.subr.mxu0 0.0
    %1849 = vmatpush1.msra.mxu0 0.0
    %1850 = vmatprep.subr.mxu0 0.0
    %1851 = vmatpush1.msra.mxu0 0.0
    %1852 = vmatprep.subr.mxu0 0.0
    %1853 = vmatpush1.msra.mxu0 0.0
    %1854 = vmatprep.subr.mxu0 0.0
    %1855 = vmatpush1.msra.mxu0 0.0
    %1856 = vmatprep.subr.mxu0 0.0
    %1857 = vmatpush1.msra.mxu0 0.0
    %1858 = vmatprep.subr.mxu0 0.0
    %1859 = vmatpush1.msra.mxu0 0.0
    %1860 = vmatprep.subr.mxu0 0.0
    %1861 = vmatpush1.msra.mxu0 0.0
    %1862 = vmatprep.subr.mxu0 0.0
    %1863 = vmatpush1.msra.mxu0 0.0
    %1864 = vmatprep.subr.mxu0 0.0
    %1865 = vmatpush1.msra.mxu0 0.0
    %1866 = vmatprep.subr.mxu0 0.0
    %1867 = vmatpush1.msra.mxu0 0.0
    %1868 = vmatprep.subr.mxu0 0.0
    %1869 = vmatpush1.msra.mxu0 0.0
    %1870 = vmatprep.subr.mxu0 0.0
    %1871 = vmatpush1.msra.mxu0 0.0
    %1872 = vmatprep.subr.mxu0 0.0
    %1873 = vmatpush1.msra.mxu0 0.0
    %1874 = vmatprep.subr.mxu0 0.0
    %1875 = vmatpush1.msra.mxu0 0.0
    %1876 = vmatprep.subr.mxu0 0.0
    %1877 = vmatpush1.msra.mxu0 0.0
    %1878 = vmatprep.subr.mxu0 0.0
    %1879 = vmatpush1.msra.mxu0 0.0
    %1880 = vmatprep.subr.mxu0 0.0
    %1881 = vmatpush1.msra.mxu0 0.0
    %1882 = vmatprep.subr.mxu0 0.0
    %1883 = vmatpush1.msra.mxu0 0.0
    %1884 = vmatprep.mubr.f32.mxu0 0.0
    %1885 = vmatmul.mubr.f32.gmra.mrb[0].mxu0 %v1815
    %v1886 = vpop.f32.mrb[0].mxu0
    %v1887 = vadd.f32 %v1811, %v1886
    %v1888 = vpop.f32.mrb[0].mxu0
    %1889 = vdwg.mxu0
    %vm1890 = vcmask 9216
    %1891 = vst.msk [vmem:[#allocation2] sm:$0x3] %vm1890, %v1887
    // Predicated region
    $region10: #{tpu_custom_call.1} parent=1 // pred_check
      _
    $region11: #{tpu_custom_call.1} parent=1 // pred_check_branch
      %1893 = sbr.rel (0) target = $region13
    $region12: #{tpu_custom_call.1} parent=1 // pred_region
      %s1895 = ssub.s32 32, 32
      %1896 = vsyncadd [#allocation3], %s1895
      %s1898 = sshll.u32 [#allocation2], 4
      %s1899 = int_to_ptr.vmem [resolvable:$true] %s1898
      %1901 = dma.vmem_to_hbm [thread:$0]  %s1899, 32, %s2, [#allocation3]
    $region13: #{tpu_custom_call.1} parent=1 // pred_fallthru
      _
    // Predicated region
    $region14: #{tpu_custom_call.1} parent=1 // pred_check
      _
    $region15: #{tpu_custom_call.1} parent=1 // pred_check_branch
      %1903 = sbr.rel (0) target = $region17
    $region16: #{tpu_custom_call.1} parent=1 // pred_region
      %1904 = dma.done [#allocation3], 32
    $region17: #{tpu_custom_call.1} parent=1 // pred_fallthru
      _
    %1905 = vsyncpa [#allocation3], 1

</llo_original>
